<compile_context>
chip_gen: v5e
topology: v5e:2x2
jax: 0.10.0
libtpu: 0.0.40
codegen_flags: <defaults>
</compile_context>

<pallas_src>
import functools

import jax
import jax.numpy as jnp
from jax import lax
from jax.experimental import pallas as pl
from jax.experimental.pallas import tpu as pltpu

EPS = 1e-5
NEG_SLOPE = 0.1          # nn.LeakyReLU(0.1)
LANE = 128               # TPU lane width (minor-dim granule)


def _leaky_relu(x):
    return jnp.where(x > 0, x, NEG_SLOPE * x)


# ----------------------------------------------------------------------------
# Kernels
# ----------------------------------------------------------------------------
def _bn_relu_conv_tile(center, halo, scale, shift, wf, *, w, ar, pad, tl):
    """Folded-BN -> LeakyReLU -> dilated conv for one (C, tl) tile.

    center: (C, tl)       raw activations of this tile
    halo:   (C, 2*pad)    raw activations just left/right of the tile
    scale/shift: (C, 1)   folded BatchNorm affine (batch statistics)
    wf:     (C, w*C) bf16 conv weights, taps fused along the contraction dim
    returns (C, tl) f32   conv output (bias NOT added)
    """
    i = pl.program_id(1)
    n_tiles = pl.num_programs(1)

    act_c = _leaky_relu(center * scale + shift)             # (C, tl)     f32
    act_h = _leaky_relu(halo * scale + shift)               # (C, 2*pad)  f32

    # Zero-pad the *activated* signal outside the sequence (matches Conv1d
    # zero padding in the PyTorch module).  Only 2*pad columns are masked.
    not_first = (i > 0).astype(jnp.float32)
    not_last = (i < n_tiles - 1).astype(jnp.float32)
    left = act_h[:, :pad] * not_first
    right = act_h[:, pad:] * not_last
    window = jnp.concatenate([left, act_c, right], axis=1)  # (C, tl + 2*pad)

    # Fuse the w dilated taps into a single matmul with K = w*C.
    taps = jnp.concatenate(
        [window[:, k * ar:k * ar + tl] for k in range(w)], axis=0)   # (w*C, tl)
    return jnp.dot(wf, taps.astype(jnp.bfloat16),
                   preferred_element_type=jnp.float32)               # (C, tl)


def _stage1_kernel(xc_ref, xh_ref, sc_ref, sh_ref, wf_ref, b_ref,
                   out1_ref, stats_ref, *, w, ar, pad, tl):
    conv = _bn_relu_conv_tile(xc_ref[0], xh_ref[0, 0], sc_ref[...], sh_ref[...],
                              wf_ref[...], w=w, ar=ar, pad=pad, tl=tl)
    out1 = conv + b_ref[...]                                 # (C, tl)
    out1_ref[0, :, :] = out1
    # Per-tile partial sums (sum, sum-of-squares) for BN2 batch statistics,
    # fused with the out1 write so no extra HBM pass over out1 is needed.
    stats_ref[0, 0, :, :] = jnp.concatenate(
        [jnp.sum(out1, axis=1, keepdims=True),
         jnp.sum(out1 * out1, axis=1, keepdims=True)], axis=1)       # (C, 2)


def _stage2_kernel(ac_ref, ah_ref, xres_ref, sc_ref, sh_ref, wf_ref, b_ref,
                   out_ref, *, w, ar, pad, tl):
    conv = _bn_relu_conv_tile(ac_ref[0], ah_ref[0, 0], sc_ref[...], sh_ref[...],
                              wf_ref[...], w=w, ar=ar, pad=pad, tl=tl)
    out_ref[0, :, :] = xres_ref[0] + conv + b_ref[...]


# ----------------------------------------------------------------------------
# Wrapper helpers
# ----------------------------------------------------------------------------
def _halo_strips(a, tl, pad):
    """Per-tile left|right margins of a (N, C, L) array -> (N, L//tl, C, 2*pad).

    Margin columns outside [0, L) are zero (re-masked post-activation in the
    kernel, so the exact value there does not matter)."""
    N, C, L = a.shape
    n_tiles = L // tl
    zero = jnp.zeros((N, 1, C, pad), a.dtype)
    if n_tiles == 1:
        return jnp.concatenate([zero, zero], axis=-1)
    body = a.reshape(N, C, n_tiles, tl)
    left = jnp.transpose(body[:, :, :-1, tl - pad:], (0, 2, 1, 3))
    right = jnp.transpose(body[:, :, 1:, :pad], (0, 2, 1, 3))
    left = jnp.concatenate([zero, left], axis=1)
    right = jnp.concatenate([right, zero], axis=1)
    return jnp.concatenate([left, right], axis=-1)           # (N, nT, C, 2*pad)


def _fold_bn(gamma, beta, mean, var):
    inv = lax.rsqrt(var + EPS)
    scale = gamma * inv
    shift = beta - mean * scale
    C = gamma.shape[0]
    return (scale.reshape(C, 1).astype(jnp.float32),
            shift.reshape(C, 1).astype(jnp.float32))


def _fuse_taps(w_oiw):
    """torch Conv1d weight (C_out, C_in, w) -> (C_out, w*C_in) bf16, tap-major."""
    C_out, C_in, w = w_oiw.shape
    return jnp.transpose(w_oiw, (0, 2, 1)).reshape(C_out, w * C_in).astype(jnp.bfloat16)


def _pick_tile(L):
    for t in (2048, 1024, 512, 256, 128):
        if L % t == 0:
            return t
    return L


# ----------------------------------------------------------------------------
# Public wrapper
# ----------------------------------------------------------------------------
def residual_unit_pallas(x_ncl, params, *, w, ar, tl=None):
    """Forward pass of ResidualUnit(l, w, ar); x_ncl is (N, C, L) like torch."""
    N, C, L = x_ncl.shape
    assert (w - 1) * ar % 2 == 0, "length only preserved when (w-1)*ar is even"
    pad = (w - 1) * ar // 2
    assert pad >= 1  # TODO(synk): w == 1 (pointwise conv) path not wired up.
    if tl is None:
        tl = _pick_tile(L)
    assert L % tl == 0 and (tl % LANE == 0 or tl == L), (L, tl)
    assert pad <= tl, "tile must be at least as wide as the conv halo"
    n_tiles = L // tl
    grid = (N, n_tiles)

    x = x_ncl.astype(jnp.float32)

    # ---- BN1 batch statistics (single traversal, done by XLA in the wrapper)
    m1 = jnp.mean(x, axis=(0, 2))
    v1 = jnp.maximum(jnp.mean(x * x, axis=(0, 2)) - m1 * m1, 0.0)
    scale1, shift1 = _fold_bn(params['bn1_gamma'], params['bn1_beta'], m1, v1)

    wf1 = _fuse_taps(params['conv1_w'])
    wf2 = _fuse_taps(params['conv2_w'])
    b1 = params['conv1_b'].reshape(C, 1).astype(jnp.float32)
    b2 = params['conv2_b'].reshape(C, 1).astype(jnp.float32)

    center_spec = pl.BlockSpec((1, C, tl), lambda n, i: (n, 0, i))
    halo_spec = pl.BlockSpec((1, 1, C, 2 * pad), lambda n, i: (n, i, 0, 0))
    cvec_spec = pl.BlockSpec((C, 1), lambda n, i: (0, 0))
    wf_spec = pl.BlockSpec((C, w * C), lambda n, i: (0, 0))
    stats_spec = pl.BlockSpec((1, 1, C, 2), lambda n, i: (n, i, 0, 0))

    cparams = pltpu.CompilerParams(
        dimension_semantics=("parallel", "parallel"),   # megacore sharding (v7x)
        vmem_limit_bytes=32 * 1024 * 1024)              # safe on v5e/v6e/v7x

    # ---- stage 1: out1 = conv1(leaky_relu(bn1(x))) + BN2 partial sums -------
    out1, part = pl.pallas_call(
        functools.partial(_stage1_kernel, w=w, ar=ar, pad=pad, tl=tl),
        grid=grid,
        in_specs=[center_spec, halo_spec, cvec_spec, cvec_spec, wf_spec, cvec_spec],
        out_specs=(center_spec, stats_spec),
        out_shape=(jax.ShapeDtypeStruct((N, C, L), jnp.float32),
                   jax.ShapeDtypeStruct((N, n_tiles, C, 2), jnp.float32)),
        compiler_params=cparams,
    )(x, _halo_strips(x, tl, pad), scale1, shift1, wf1, b1)

    # ---- BN2 batch statistics from the per-tile partial sums ----------------
    tot = jnp.sum(part, axis=(0, 1))                    # (C, 2)
    cnt = jnp.float32(N * L)
    m2 = tot[:, 0] / cnt
    v2 = jnp.maximum(tot[:, 1] / cnt - m2 * m2, 0.0)
    scale2, shift2 = _fold_bn(params['bn2_gamma'], params['bn2_beta'], m2, v2)

    # ---- stage 2: out = x + conv2(leaky_relu(bn2(out1))) --------------------
    out = pl.pallas_call(
        functools.partial(_stage2_kernel, w=w, ar=ar, pad=pad, tl=tl),
        grid=grid,
        in_specs=[center_spec, halo_spec, center_spec,
                  cvec_spec, cvec_spec, wf_spec, cvec_spec],
        out_specs=center_spec,
        out_shape=jax.ShapeDtypeStruct((N, C, L), jnp.float32),
        compiler_params=cparams,
    )(out1, _halo_strips(out1, tl, pad), x, scale2, shift2, wf2, b2)
    return out


# ----------------------------------------------------------------------------
# Pure-JAX reference (mirrors torch semantics) and test harness
# ----------------------------------------------------------------------------
def residual_unit_ref(x_ncl, params, *, w, ar):
    pad = (w - 1) * ar // 2

    def bn(x, gamma, beta):
        mean = jnp.mean(x, axis=(0, 2), keepdims=True)
        var = jnp.mean((x - mean) ** 2, axis=(0, 2), keepdims=True)
        return gamma[None, :, None] * (x - mean) * lax.rsqrt(var + EPS) + beta[None, :, None]

    def conv(x, wgt, bias):
        y = lax.conv_general_dilated(
            x, wgt, window_strides=(1,), padding=[(pad, pad)],
            rhs_dilation=(ar,), dimension_numbers=('NCH', 'OIH', 'NCH'))
        return y + bias[None, :, None]

    out = conv(_leaky_relu(bn(x_ncl, params['bn1_gamma'], params['bn1_beta'])),
               params['conv1_w'], params['conv1_b'])
    out = conv(_leaky_relu(bn(out, params['bn2_gamma'], params['bn2_beta'])),
               params['conv2_w'], params['conv2_b'])
    return x_ncl + out


def init_params(key, l, w):
    ks = jax.random.split(key, 6)
    return {
        'bn1_gamma': 1.0 + 0.1 * jax.random.normal(ks[0], (l,), jnp.float32),
        'bn1_beta': 0.1 * jax.random.normal(ks[1], (l,), jnp.float32),
        'bn2_gamma': 1.0 + 0.1 * jax.random.normal(ks[2], (l,), jnp.float32),
        'bn2_beta': 0.1 * jax.random.normal(ks[3], (l,), jnp.float32),
        'conv1_w': 0.1 * jax.random.normal(ks[4], (l, l, w), jnp.float32),
        'conv1_b': 0.05 * jnp.arange(l, dtype=jnp.float32) / l,
        'conv2_w': 0.1 * jax.random.normal(ks[5], (l, l, w), jnp.float32),
        'conv2_b': -0.05 * jnp.arange(l, dtype=jnp.float32) / l,
    }


if __name__ == "__main__":
    # ResidualUnit(l=32, w=3, ar=2); input (batch=2, channels=32, seq=512).
    # tl=128 -> 4 sequence tiles per batch element, exercising the halo logic.
    l, w, ar = 32, 3, 2
    N, L = 2, 512

    key = jax.random.PRNGKey(0)
    kx, kp = jax.random.split(key)
    x = jax.random.normal(kx, (N, l, L), jnp.float32)
    params = init_params(kp, l, w)

    fwd = jax.jit(functools.partial(residual_unit_pallas, w=w, ar=ar, tl=128))
    out = jax.block_until_ready(fwd(x, params))

    ref = jax.block_until_ready(residual_unit_ref(x, params, w=w, ar=ar))
    assert out.shape == (N, l, L)
    err = float(jnp.max(jnp.abs(out - ref)))
    # bf16 MXU operands (f32 accumulation) -> slightly looser tolerance than f32.
    assert err < 3e-2, f"max abs err {err}"
    print("KERNEL_OK")
</pallas_src>

<mosaic_0001>
module attributes {stable_mosaic.version = 11 : i64} {
  func.func @_stage1_kernel(%arg0: i32, %arg1: i32, %arg2: memref<1x32x128xf32, #tpu.memory_space<vmem>>, %arg3: memref<1x1x32x4xf32, #tpu.memory_space<vmem>>, %arg4: memref<32x1xf32, #tpu.memory_space<vmem>>, %arg5: memref<32x1xf32, #tpu.memory_space<vmem>>, %arg6: memref<32x96xbf16, #tpu.memory_space<vmem>>, %arg7: memref<32x1xf32, #tpu.memory_space<vmem>>, %arg8: memref<1x32x128xf32, #tpu.memory_space<vmem>>, %arg9: memref<1x1x32x2xf32, #tpu.memory_space<vmem>>) attributes {dimension_semantics = [#tpu.dimension_semantics<parallel>, #tpu.dimension_semantics<parallel>], iteration_bounds = array<i64: 2, 4>, scalar_prefetch = 0 : i64, scratch_operands = 0 : i64, tpu.core_type = #tpu.core_type<tc>, window_params = [{transform_indices = @transform_0, window_bounds = array<i64: 1, 32, 128>}, {transform_indices = @transform_1, window_bounds = array<i64: 1, 1, 32, 4>}, {pipeline_mode = #tpu.pipeline_mode<synchronous>, transform_indices = @transform_2, window_bounds = array<i64: 32, 1>}, {pipeline_mode = #tpu.pipeline_mode<synchronous>, transform_indices = @transform_3, window_bounds = array<i64: 32, 1>}, {pipeline_mode = #tpu.pipeline_mode<synchronous>, transform_indices = @transform_4, window_bounds = array<i64: 32, 96>}, {pipeline_mode = #tpu.pipeline_mode<synchronous>, transform_indices = @transform_5, window_bounds = array<i64: 32, 1>}, {transform_indices = @transform_6, window_bounds = array<i64: 1, 32, 128>}, {transform_indices = @transform_7, window_bounds = array<i64: 1, 1, 32, 2>}]} {
    %c0 = arith.constant 0 : index
    %c0_0 = arith.constant 0 : index
    %c0_1 = arith.constant 0 : index
    %0 = vector.load %arg2[%c0, %c0_0, %c0_1] : memref<1x32x128xf32, #tpu.memory_space<vmem>>, vector<1x32x128xf32>
    %1 = vector.shape_cast %0 : vector<1x32x128xf32> to vector<32x128xf32>
    %c0_2 = arith.constant 0 : index
    %c0_3 = arith.constant 0 : index
    %c0_4 = arith.constant 0 : index
    %c0_5 = arith.constant 0 : index
    %2 = vector.load %arg3[%c0_2, %c0_3, %c0_4, %c0_5] : memref<1x1x32x4xf32, #tpu.memory_space<vmem>>, vector<1x1x32x4xf32>
    %3 = vector.shape_cast %2 : vector<1x1x32x4xf32> to vector<32x4xf32>
    %c0_6 = arith.constant 0 : index
    %c0_7 = arith.constant 0 : index
    %4 = vector.load %arg4[%c0_6, %c0_7] : memref<32x1xf32, #tpu.memory_space<vmem>>, vector<32x1xf32>
    %c0_8 = arith.constant 0 : index
    %c0_9 = arith.constant 0 : index
    %5 = vector.load %arg5[%c0_8, %c0_9] : memref<32x1xf32, #tpu.memory_space<vmem>>, vector<32x1xf32>
    %c0_10 = arith.constant 0 : index
    %c0_11 = arith.constant 0 : index
    %6 = vector.load %arg6[%c0_10, %c0_11] : memref<32x96xbf16, #tpu.memory_space<vmem>>, vector<32x96xbf16>
    %7 = vector.broadcast %4 : vector<32x1xf32> to vector<32x128xf32>
    %8 = arith.mulf %1, %7 : vector<32x128xf32>
    %9 = vector.broadcast %5 : vector<32x1xf32> to vector<32x128xf32>
    %10 = arith.addf %8, %9 : vector<32x128xf32>
    %cst = arith.constant 0.000000e+00 : f32
    %11 = vector.broadcast %cst : f32 to vector<32x128xf32>
    %12 = arith.cmpf ogt, %10, %11 : vector<32x128xf32>
    %cst_12 = arith.constant 1.000000e-01 : f32
    %13 = vector.broadcast %cst_12 : f32 to vector<32x128xf32>
    %14 = arith.mulf %13, %10 : vector<32x128xf32>
    %15 = arith.select %12, %10, %14 : vector<32x128xi1>, vector<32x128xf32>
    %16 = vector.broadcast %4 : vector<32x1xf32> to vector<32x4xf32>
    %17 = arith.mulf %3, %16 : vector<32x4xf32>
    %18 = vector.broadcast %5 : vector<32x1xf32> to vector<32x4xf32>
    %19 = arith.addf %17, %18 : vector<32x4xf32>
    %cst_13 = arith.constant 0.000000e+00 : f32
    %20 = vector.broadcast %cst_13 : f32 to vector<32x4xf32>
    %21 = arith.cmpf ogt, %19, %20 : vector<32x4xf32>
    %cst_14 = arith.constant 1.000000e-01 : f32
    %22 = vector.broadcast %cst_14 : f32 to vector<32x4xf32>
    %23 = arith.mulf %22, %19 : vector<32x4xf32>
    %24 = arith.select %21, %19, %23 : vector<32x4xi1>, vector<32x4xf32>
    %c0_i32 = arith.constant 0 : i32
    %25 = arith.cmpi sgt, %arg1, %c0_i32 : i32
    %26 = arith.extui %25 : i1 to i32
    %27 = arith.sitofp %26 : i32 to f32
    %c3_i32 = arith.constant 3 : i32
    %28 = arith.cmpi slt, %arg1, %c3_i32 : i32
    %29 = arith.extui %28 : i1 to i32
    %30 = arith.sitofp %29 : i32 to f32
    %31 = vector.extract_strided_slice %24 {offsets = [0, 0], sizes = [32, 2], strides = [1, 1]} : vector<32x4xf32> to vector<32x2xf32>
    %32 = vector.broadcast %27 : f32 to vector<32x2xf32>
    %33 = arith.mulf %31, %32 : vector<32x2xf32>
    %34 = vector.extract_strided_slice %24 {offsets = [0, 2], sizes = [32, 2], strides = [1, 1]} : vector<32x4xf32> to vector<32x2xf32>
    %35 = vector.broadcast %30 : f32 to vector<32x2xf32>
    %36 = arith.mulf %34, %35 : vector<32x2xf32>
    %37 = tpu.concatenate %33, %15, %36 in 1 : vector<32x2xf32>, vector<32x128xf32>, vector<32x2xf32> -> vector<32x132xf32>
    %38 = vector.extract_strided_slice %37 {offsets = [0, 0], sizes = [32, 128], strides = [1, 1]} : vector<32x132xf32> to vector<32x128xf32>
    %39 = vector.extract_strided_slice %37 {offsets = [0, 2], sizes = [32, 128], strides = [1, 1]} : vector<32x132xf32> to vector<32x128xf32>
    %40 = vector.extract_strided_slice %37 {offsets = [0, 4], sizes = [32, 128], strides = [1, 1]} : vector<32x132xf32> to vector<32x128xf32>
    %41 = tpu.concatenate %38, %39, %40 in 0 : vector<32x128xf32>, vector<32x128xf32>, vector<32x128xf32> -> vector<96x128xf32>
    %42 = arith.truncf %41 : vector<96x128xf32> to vector<96x128xbf16>
    %cst_15 = arith.constant dense<0.000000e+00> : vector<32x128xf32>
    %43 = tpu.matmul %6, %42, %cst_15 {dimension_numbers = #tpu.dot_dimension_numbers<[1], [0], [0], [1], [0, 0, 1, 1], [], []>} : vector<32x96xbf16>, vector<96x128xbf16>, vector<32x128xf32> -> vector<32x128xf32>
    %c0_16 = arith.constant 0 : index
    %c0_17 = arith.constant 0 : index
    %44 = vector.load %arg7[%c0_16, %c0_17] : memref<32x1xf32, #tpu.memory_space<vmem>>, vector<32x1xf32>
    %45 = vector.broadcast %44 : vector<32x1xf32> to vector<32x128xf32>
    %46 = arith.addf %43, %45 : vector<32x128xf32>
    %c0_18 = arith.constant 0 : index
    %c0_19 = arith.constant 0 : index
    %c0_20 = arith.constant 0 : index
    %47 = vector.load %arg8[%c0_18, %c0_19, %c0_20] : memref<1x32x128xf32, #tpu.memory_space<vmem>>, vector<1x32x128xf32>
    %48 = vector.shape_cast %47 : vector<1x32x128xf32> to vector<32x128xf32>
    %49 = vector.shape_cast %46 : vector<32x128xf32> to vector<1x32x128xf32>
    tpu.vector_store %arg8[%c0_18, %c0_19, %c0_20], %49 {strides = array<i32>} : memref<1x32x128xf32, #tpu.memory_space<vmem>>, vector<1x32x128xf32>,
    %cst_21 = arith.constant dense<0.000000e+00> : vector<32xf32>
    %50 = vector.multi_reduction <add>, %46, %cst_21 [1] : vector<32x128xf32> to vector<32xf32>
    %51 = vector.shape_cast %50 : vector<32xf32> to vector<32x1xf32>
    %52 = arith.mulf %46, %46 : vector<32x128xf32>
    %cst_22 = arith.constant dense<0.000000e+00> : vector<32xf32>
    %53 = vector.multi_reduction <add>, %52, %cst_22 [1] : vector<32x128xf32> to vector<32xf32>
    %54 = vector.shape_cast %53 : vector<32xf32> to vector<32x1xf32>
    %55 = tpu.concatenate %51, %54 in 1 : vector<32x1xf32>, vector<32x1xf32> -> vector<32x2xf32>
    %c0_23 = arith.constant 0 : index
    %c0_24 = arith.constant 0 : index
    %c0_25 = arith.constant 0 : index
    %c0_26 = arith.constant 0 : index
    %56 = vector.load %arg9[%c0_23, %c0_24, %c0_25, %c0_26] : memref<1x1x32x2xf32, #tpu.memory_space<vmem>>, vector<1x1x32x2xf32>
    %57 = vector.shape_cast %56 : vector<1x1x32x2xf32> to vector<32x2xf32>
    %58 = vector.shape_cast %55 : vector<32x2xf32> to vector<1x1x32x2xf32>
    tpu.vector_store %arg9[%c0_23, %c0_24, %c0_25, %c0_26], %58 {strides = array<i32>} : memref<1x1x32x2xf32, #tpu.memory_space<vmem>>, vector<1x1x32x2xf32>,
    return
  }
  func.func @transform_0(%arg0: i32, %arg1: i32) -> (i32, i32, i32) {
    %c0_i32 = arith.constant 0 : i32
    %c0_i32_0 = arith.constant 0 : i32
    return %arg0, %c0_i32, %arg1 : i32, i32, i32
  }
  func.func @transform_1(%arg0: i32, %arg1: i32) -> (i32, i32, i32, i32) {
    %c0_i32 = arith.constant 0 : i32
    %c0_i32_0 = arith.constant 0 : i32
    %c0_i32_1 = arith.constant 0 : i32
    return %arg0, %arg1, %c0_i32, %c0_i32_0 : i32, i32, i32, i32
  }
  func.func @transform_2(%arg0: i32, %arg1: i32) -> (i32, i32) {
    %c0_i32 = arith.constant 0 : i32
    %c0_i32_0 = arith.constant 0 : i32
    %c0_i32_1 = arith.constant 0 : i32
    return %c0_i32, %c0_i32_0 : i32, i32
  }
  func.func @transform_3(%arg0: i32, %arg1: i32) -> (i32, i32) {
    %c0_i32 = arith.constant 0 : i32
    %c0_i32_0 = arith.constant 0 : i32
    %c0_i32_1 = arith.constant 0 : i32
    return %c0_i32, %c0_i32_0 : i32, i32
  }
  func.func @transform_4(%arg0: i32, %arg1: i32) -> (i32, i32) {
    %c0_i32 = arith.constant 0 : i32
    %c0_i32_0 = arith.constant 0 : i32
    %c0_i32_1 = arith.constant 0 : i32
    return %c0_i32, %c0_i32_0 : i32, i32
  }
  func.func @transform_5(%arg0: i32, %arg1: i32) -> (i32, i32) {
    %c0_i32 = arith.constant 0 : i32
    %c0_i32_0 = arith.constant 0 : i32
    %c0_i32_1 = arith.constant 0 : i32
    return %c0_i32, %c0_i32_0 : i32, i32
  }
  func.func @transform_6(%arg0: i32, %arg1: i32) -> (i32, i32, i32) {
    %c0_i32 = arith.constant 0 : i32
    %c0_i32_0 = arith.constant 0 : i32
    return %arg0, %c0_i32, %arg1 : i32, i32, i32
  }
  func.func @transform_7(%arg0: i32, %arg1: i32) -> (i32, i32, i32, i32) {
    %c0_i32 = arith.constant 0 : i32
    %c0_i32_0 = arith.constant 0 : i32
    %c0_i32_1 = arith.constant 0 : i32
    return %arg0, %arg1, %c0_i32, %c0_i32_0 : i32, i32, i32, i32
  }
}

module attributes {stable_mosaic.version = 11 : i64} {
  func.func @_stage2_kernel(%arg0: i32, %arg1: i32, %arg2: memref<1x32x128xf32, #tpu.memory_space<vmem>>, %arg3: memref<1x1x32x4xf32, #tpu.memory_space<vmem>>, %arg4: memref<1x32x128xf32, #tpu.memory_space<vmem>>, %arg5: memref<32x1xf32, #tpu.memory_space<vmem>>, %arg6: memref<32x1xf32, #tpu.memory_space<vmem>>, %arg7: memref<32x96xbf16, #tpu.memory_space<vmem>>, %arg8: memref<32x1xf32, #tpu.memory_space<vmem>>, %arg9: memref<1x32x128xf32, #tpu.memory_space<vmem>>) attributes {dimension_semantics = [#tpu.dimension_semantics<parallel>, #tpu.dimension_semantics<parallel>], iteration_bounds = array<i64: 2, 4>, scalar_prefetch = 0 : i64, scratch_operands = 0 : i64, tpu.core_type = #tpu.core_type<tc>, window_params = [{transform_indices = @transform_0, window_bounds = array<i64: 1, 32, 128>}, {transform_indices = @transform_1, window_bounds = array<i64: 1, 1, 32, 4>}, {transform_indices = @transform_2, window_bounds = array<i64: 1, 32, 128>}, {pipeline_mode = #tpu.pipeline_mode<synchronous>, transform_indices = @transform_3, window_bounds = array<i64: 32, 1>}, {pipeline_mode = #tpu.pipeline_mode<synchronous>, transform_indices = @transform_4, window_bounds = array<i64: 32, 1>}, {pipeline_mode = #tpu.pipeline_mode<synchronous>, transform_indices = @transform_5, window_bounds = array<i64: 32, 96>}, {pipeline_mode = #tpu.pipeline_mode<synchronous>, transform_indices = @transform_6, window_bounds = array<i64: 32, 1>}, {transform_indices = @transform_7, window_bounds = array<i64: 1, 32, 128>}]} {
    %c0 = arith.constant 0 : index
    %c0_0 = arith.constant 0 : index
    %c0_1 = arith.constant 0 : index
    %0 = vector.load %arg2[%c0, %c0_0, %c0_1] : memref<1x32x128xf32, #tpu.memory_space<vmem>>, vector<1x32x128xf32>
    %1 = vector.shape_cast %0 : vector<1x32x128xf32> to vector<32x128xf32>
    %c0_2 = arith.constant 0 : index
    %c0_3 = arith.constant 0 : index
    %c0_4 = arith.constant 0 : index
    %c0_5 = arith.constant 0 : index
    %2 = vector.load %arg3[%c0_2, %c0_3, %c0_4, %c0_5] : memref<1x1x32x4xf32, #tpu.memory_space<vmem>>, vector<1x1x32x4xf32>
    %3 = vector.shape_cast %2 : vector<1x1x32x4xf32> to vector<32x4xf32>
    %c0_6 = arith.constant 0 : index
    %c0_7 = arith.constant 0 : index
    %4 = vector.load %arg5[%c0_6, %c0_7] : memref<32x1xf32, #tpu.memory_space<vmem>>, vector<32x1xf32>
    %c0_8 = arith.constant 0 : index
    %c0_9 = arith.constant 0 : index
    %5 = vector.load %arg6[%c0_8, %c0_9] : memref<32x1xf32, #tpu.memory_space<vmem>>, vector<32x1xf32>
    %c0_10 = arith.constant 0 : index
    %c0_11 = arith.constant 0 : index
    %6 = vector.load %arg7[%c0_10, %c0_11] : memref<32x96xbf16, #tpu.memory_space<vmem>>, vector<32x96xbf16>
    %7 = vector.broadcast %4 : vector<32x1xf32> to vector<32x128xf32>
    %8 = arith.mulf %1, %7 : vector<32x128xf32>
    %9 = vector.broadcast %5 : vector<32x1xf32> to vector<32x128xf32>
    %10 = arith.addf %8, %9 : vector<32x128xf32>
    %cst = arith.constant 0.000000e+00 : f32
    %11 = vector.broadcast %cst : f32 to vector<32x128xf32>
    %12 = arith.cmpf ogt, %10, %11 : vector<32x128xf32>
    %cst_12 = arith.constant 1.000000e-01 : f32
    %13 = vector.broadcast %cst_12 : f32 to vector<32x128xf32>
    %14 = arith.mulf %13, %10 : vector<32x128xf32>
    %15 = arith.select %12, %10, %14 : vector<32x128xi1>, vector<32x128xf32>
    %16 = vector.broadcast %4 : vector<32x1xf32> to vector<32x4xf32>
    %17 = arith.mulf %3, %16 : vector<32x4xf32>
    %18 = vector.broadcast %5 : vector<32x1xf32> to vector<32x4xf32>
    %19 = arith.addf %17, %18 : vector<32x4xf32>
    %cst_13 = arith.constant 0.000000e+00 : f32
    %20 = vector.broadcast %cst_13 : f32 to vector<32x4xf32>
    %21 = arith.cmpf ogt, %19, %20 : vector<32x4xf32>
    %cst_14 = arith.constant 1.000000e-01 : f32
    %22 = vector.broadcast %cst_14 : f32 to vector<32x4xf32>
    %23 = arith.mulf %22, %19 : vector<32x4xf32>
    %24 = arith.select %21, %19, %23 : vector<32x4xi1>, vector<32x4xf32>
    %c0_i32 = arith.constant 0 : i32
    %25 = arith.cmpi sgt, %arg1, %c0_i32 : i32
    %26 = arith.extui %25 : i1 to i32
    %27 = arith.sitofp %26 : i32 to f32
    %c3_i32 = arith.constant 3 : i32
    %28 = arith.cmpi slt, %arg1, %c3_i32 : i32
    %29 = arith.extui %28 : i1 to i32
    %30 = arith.sitofp %29 : i32 to f32
    %31 = vector.extract_strided_slice %24 {offsets = [0, 0], sizes = [32, 2], strides = [1, 1]} : vector<32x4xf32> to vector<32x2xf32>
    %32 = vector.broadcast %27 : f32 to vector<32x2xf32>
    %33 = arith.mulf %31, %32 : vector<32x2xf32>
    %34 = vector.extract_strided_slice %24 {offsets = [0, 2], sizes = [32, 2], strides = [1, 1]} : vector<32x4xf32> to vector<32x2xf32>
    %35 = vector.broadcast %30 : f32 to vector<32x2xf32>
    %36 = arith.mulf %34, %35 : vector<32x2xf32>
    %37 = tpu.concatenate %33, %15, %36 in 1 : vector<32x2xf32>, vector<32x128xf32>, vector<32x2xf32> -> vector<32x132xf32>
    %38 = vector.extract_strided_slice %37 {offsets = [0, 0], sizes = [32, 128], strides = [1, 1]} : vector<32x132xf32> to vector<32x128xf32>
    %39 = vector.extract_strided_slice %37 {offsets = [0, 2], sizes = [32, 128], strides = [1, 1]} : vector<32x132xf32> to vector<32x128xf32>
    %40 = vector.extract_strided_slice %37 {offsets = [0, 4], sizes = [32, 128], strides = [1, 1]} : vector<32x132xf32> to vector<32x128xf32>
    %41 = tpu.concatenate %38, %39, %40 in 0 : vector<32x128xf32>, vector<32x128xf32>, vector<32x128xf32> -> vector<96x128xf32>
    %42 = arith.truncf %41 : vector<96x128xf32> to vector<96x128xbf16>
    %cst_15 = arith.constant dense<0.000000e+00> : vector<32x128xf32>
    %43 = tpu.matmul %6, %42, %cst_15 {dimension_numbers = #tpu.dot_dimension_numbers<[1], [0], [0], [1], [0, 0, 1, 1], [], []>} : vector<32x96xbf16>, vector<96x128xbf16>, vector<32x128xf32> -> vector<32x128xf32>
    %c0_16 = arith.constant 0 : index
    %c0_17 = arith.constant 0 : index
    %c0_18 = arith.constant 0 : index
    %44 = vector.load %arg4[%c0_16, %c0_17, %c0_18] : memref<1x32x128xf32, #tpu.memory_space<vmem>>, vector<1x32x128xf32>
    %45 = vector.shape_cast %44 : vector<1x32x128xf32> to vector<32x128xf32>
    %46 = arith.addf %45, %43 : vector<32x128xf32>
    %c0_19 = arith.constant 0 : index
    %c0_20 = arith.constant 0 : index
    %47 = vector.load %arg8[%c0_19, %c0_20] : memref<32x1xf32, #tpu.memory_space<vmem>>, vector<32x1xf32>
    %48 = vector.broadcast %47 : vector<32x1xf32> to vector<32x128xf32>
    %49 = arith.addf %46, %48 : vector<32x128xf32>
    %c0_21 = arith.constant 0 : index
    %c0_22 = arith.constant 0 : index
    %c0_23 = arith.constant 0 : index
    %50 = vector.load %arg9[%c0_21, %c0_22, %c0_23] : memref<1x32x128xf32, #tpu.memory_space<vmem>>, vector<1x32x128xf32>
    %51 = vector.shape_cast %50 : vector<1x32x128xf32> to vector<32x128xf32>
    %52 = vector.shape_cast %49 : vector<32x128xf32> to vector<1x32x128xf32>
    tpu.vector_store %arg9[%c0_21, %c0_22, %c0_23], %52 {strides = array<i32>} : memref<1x32x128xf32, #tpu.memory_space<vmem>>, vector<1x32x128xf32>,
    return
  }
  func.func @transform_0(%arg0: i32, %arg1: i32) -> (i32, i32, i32) {
    %c0_i32 = arith.constant 0 : i32
    %c0_i32_0 = arith.constant 0 : i32
    return %arg0, %c0_i32, %arg1 : i32, i32, i32
  }
  func.func @transform_1(%arg0: i32, %arg1: i32) -> (i32, i32, i32, i32) {
    %c0_i32 = arith.constant 0 : i32
    %c0_i32_0 = arith.constant 0 : i32
    %c0_i32_1 = arith.constant 0 : i32
    return %arg0, %arg1, %c0_i32, %c0_i32_0 : i32, i32, i32, i32
  }
  func.func @transform_2(%arg0: i32, %arg1: i32) -> (i32, i32, i32) {
    %c0_i32 = arith.constant 0 : i32
    %c0_i32_0 = arith.constant 0 : i32
    return %arg0, %c0_i32, %arg1 : i32, i32, i32
  }
  func.func @transform_3(%arg0: i32, %arg1: i32) -> (i32, i32) {
    %c0_i32 = arith.constant 0 : i32
    %c0_i32_0 = arith.constant 0 : i32
    %c0_i32_1 = arith.constant 0 : i32
    return %c0_i32, %c0_i32_0 : i32, i32
  }
  func.func @transform_4(%arg0: i32, %arg1: i32) -> (i32, i32) {
    %c0_i32 = arith.constant 0 : i32
    %c0_i32_0 = arith.constant 0 : i32
    %c0_i32_1 = arith.constant 0 : i32
    return %c0_i32, %c0_i32_0 : i32, i32
  }
  func.func @transform_5(%arg0: i32, %arg1: i32) -> (i32, i32) {
    %c0_i32 = arith.constant 0 : i32
    %c0_i32_0 = arith.constant 0 : i32
    %c0_i32_1 = arith.constant 0 : i32
    return %c0_i32, %c0_i32_0 : i32, i32
  }
  func.func @transform_6(%arg0: i32, %arg1: i32) -> (i32, i32) {
    %c0_i32 = arith.constant 0 : i32
    %c0_i32_0 = arith.constant 0 : i32
    %c0_i32_1 = arith.constant 0 : i32
    return %c0_i32, %c0_i32_0 : i32, i32
  }
  func.func @transform_7(%arg0: i32, %arg1: i32) -> (i32, i32, i32) {
    %c0_i32 = arith.constant 0 : i32
    %c0_i32_0 = arith.constant 0 : i32
    return %arg0, %c0_i32, %arg1 : i32, i32, i32
  }
}

</mosaic_0001>

<llo_original>
// kernel: residual_unit_pallas.2
$region0: #{residual_unit_pallas.2}
  #allocation0 [shape = 'u32[]', space=smem, size = 0x4, offset = 0x4, fixed_abs, tag = 'smem constant byte address 0x4 - core index']
  #allocation1 [shape = 'u32[72,128]{1,0:T(1,128)}', space=vmem, size = 0x9000, scoped, tag = 'internal scratch']
  %s0 = inlined_call_operand.vmem [shape: f32[2,32,512], index: 0, kind: input, shape index: {}]
  %s1 = inlined_call_operand.vmem [shape: f32[2,4,32,4], index: 1, kind: input, shape index: {}]
  %s2 = inlined_call_operand.vmem [shape: f32[32,1], index: 2, kind: input, shape index: {}]
  %s3 = inlined_call_operand.vmem [shape: f32[32,1], index: 3, kind: input, shape index: {}]
  %s4 = inlined_call_operand.vmem [shape: bf16[32,96], index: 4, kind: input, shape index: {}]
  %s5 = inlined_call_operand.vmem [shape: f32[32,1], index: 5, kind: input, shape index: {}]
  %s6 = inlined_call_operand.vmem [shape: f32[2,32,512], index: 6, kind: output, shape index: {0}]
  %s7 = inlined_call_operand.vmem [shape: f32[2,4,32,2], index: 7, kind: output, shape index: {1}]
  %8 = xla_tuple %s6, %s7
  %s9 = sld [smem:[#allocation0]]
  $region137: #{residual_unit_pallas.2} parent=0
    _
  %s11 = ssub.s32 1, %s9
  %s12 = scalar_select 0, %s11, %s9
  $region1: #{residual_unit_pallas.2} parent=0
    #allocation2 [shape = 'u8[32768]{0}', space=vmem, size = 0x8000, scoped, tag = 'input window, operand 0']
    #allocation3 [shape = 'u8[32768]{0}', space=vmem, size = 0x8000, scoped, tag = 'output window, operand 0']
    loop: start=0, step=1, limit=10
    $region2: #{residual_unit_pallas.2} parent=1 // loop_pre_header
      _
    $region3: #{residual_unit_pallas.2} parent=1 // loop_header
      %s14 = sphi 0, %s18
      %p15 = scmp.ge.s32.totalorder %s14, 10
      %s21 = sphi 0, %s33
      %s22 = sphi 0, %s29
      %s23 = sphi 0, %s21
      %s24 = sphi 0, %s22
      %s25 = sphi 0, %s23
      %s26 = sphi 0, %s24
      %s38 = sphi 0, %s40
      %s41 = sphi 0, %s38
      %s42 = sphi 0, %s41
      %s58 = sphi 0, %s42
      %s66 = sphi 0, %s68
      %s69 = sphi 0, %s66
      %s70 = sphi 0, %s69
      %s86 = sphi 0, %s70
      %s90 = sphi 0, %s90
      %s92 = sphi 0, %s90
      %s93 = sphi 0, %s92
      %s107 = sphi 0, %s93
      %s111 = sphi 0, %s111
      %s113 = sphi 0, %s111
      %s114 = sphi 0, %s113
      %s128 = sphi 0, %s114
      %s132 = sphi 0, %s132
      %s134 = sphi 0, %s132
      %s135 = sphi 0, %s134
      %s149 = sphi 0, %s135
      %s153 = sphi 0, %s153
      %s155 = sphi 0, %s153
      %s156 = sphi 0, %s155
      %s170 = sphi 0, %s156
      %s178 = sphi 0, %s180
      %s181 = sphi 0, %s178
      %s182 = sphi 0, %s181
      %s198 = sphi 0, %s182
      %s206 = sphi 0, %s208
      %s209 = sphi 0, %s206
      %s210 = sphi 0, %s209
      %s226 = sphi 0, %s210
    $region4: #{residual_unit_pallas.2} parent=1 // loop_header_branch
      %17 = sbr.rel (%p15) target = $region8
    $region5: #{residual_unit_pallas.2} parent=1 // loop_body
      %s19 = ssub.s32 %s14, 1
      %s20 = ssub.s32 %s14, 2
      %s27 = sadd.s32 1, %s22
      %p28 = scmp.ge.s32.totalorder %s27, 4
      %s29 = scalar_select %p28, 0, %s27
      %s30 = sadd.s32 1, %s21
      %s31 = scalar_select %p28, %s30, %s21
      %p32 = scmp.ge.s32.totalorder %s31, 2
      %s33 = scalar_select %p32, 0, %s31
      %s34 = ssub.s32 %s21, %s33
      %s35 = ssub.s32 %s22, %s29
      %s36 = sor.u32 %s34, %s35
      %p37 = scmp.eq.s32.totalorder %s36, 0
      %s39 = sadd.s32 %s38, 1
      %s40 = scalar_select %p37, %s38, %s39
      %p43 = pneg %p37
      %p44 = scmp.eq.s32.totalorder %s14, 7
      %p45 = por %p43, %p44
      %p46 = scmp.ne.s32.totalorder %s38, %s41
      %p47 = scmp.eq.s32.totalorder %s14, 0
      %p48 = por %p46, %p47
      %p49 = scmp.ne.s32.totalorder %s38, %s41
      %p50 = scmp.eq.s32.totalorder %s19, 7
      %p51 = por %p49, %p50
      %p52 = scmp.ne.s32.totalorder %s41, %s42
      %p53 = scmp.eq.s32.totalorder %s19, 0
      %p54 = por %p52, %p53
      %p55 = scmp.ne.s32.totalorder %s41, %s42
      %p56 = scmp.eq.s32.totalorder %s20, 7
      %p57 = por %p55, %p56
      %p59 = scmp.ne.s32.totalorder %s42, %s58
      %p60 = scmp.eq.s32.totalorder %s20, 0
      %p61 = por %p59, %p60
      %s62 = ssub.s32 %s21, %s33
      %s63 = ssub.s32 %s22, %s29
      %s64 = sor.u32 %s62, %s63
      %p65 = scmp.eq.s32.totalorder %s64, 0
      %s67 = sadd.s32 %s66, 1
      %s68 = scalar_select %p65, %s66, %s67
      %p71 = pneg %p65
      %p72 = scmp.eq.s32.totalorder %s14, 7
      %p73 = por %p71, %p72
      %p74 = scmp.ne.s32.totalorder %s66, %s69
      %p75 = scmp.eq.s32.totalorder %s14, 0
      %p76 = por %p74, %p75
      %p77 = scmp.ne.s32.totalorder %s66, %s69
      %p78 = scmp.eq.s32.totalorder %s19, 7
      %p79 = por %p77, %p78
      %p80 = scmp.ne.s32.totalorder %s69, %s70
      %p81 = scmp.eq.s32.totalorder %s19, 0
      %p82 = por %p80, %p81
      %p83 = scmp.ne.s32.totalorder %s69, %s70
      %p84 = scmp.eq.s32.totalorder %s20, 7
      %p85 = por %p83, %p84
      %p87 = scmp.ne.s32.totalorder %s70, %s86
      %p88 = scmp.eq.s32.totalorder %s20, 0
      %p89 = por %p87, %p88
      %s91 = sadd.s32 %s90, 1
      %p94 = scmp.eq.s32.totalorder %s14, 7
      %p95 = scmp.ne.s32.totalorder %s90, %s92
      %p96 = scmp.eq.s32.totalorder %s14, 0
      %p97 = por %p95, %p96
      %p98 = scmp.ne.s32.totalorder %s90, %s92
      %p99 = scmp.eq.s32.totalorder %s19, 7
      %p100 = por %p98, %p99
      %p101 = scmp.ne.s32.totalorder %s92, %s93
      %p102 = scmp.eq.s32.totalorder %s19, 0
      %p103 = por %p101, %p102
      %p104 = scmp.ne.s32.totalorder %s92, %s93
      %p105 = scmp.eq.s32.totalorder %s20, 7
      %p106 = por %p104, %p105
      %p108 = scmp.ne.s32.totalorder %s93, %s107
      %p109 = scmp.eq.s32.totalorder %s20, 0
      %p110 = por %p108, %p109
      %s112 = sadd.s32 %s111, 1
      %p115 = scmp.eq.s32.totalorder %s14, 7
      %p116 = scmp.ne.s32.totalorder %s111, %s113
      %p117 = scmp.eq.s32.totalorder %s14, 0
      %p118 = por %p116, %p117
      %p119 = scmp.ne.s32.totalorder %s111, %s113
      %p120 = scmp.eq.s32.totalorder %s19, 7
      %p121 = por %p119, %p120
      %p122 = scmp.ne.s32.totalorder %s113, %s114
      %p123 = scmp.eq.s32.totalorder %s19, 0
      %p124 = por %p122, %p123
      %p125 = scmp.ne.s32.totalorder %s113, %s114
      %p126 = scmp.eq.s32.totalorder %s20, 7
      %p127 = por %p125, %p126
      %p129 = scmp.ne.s32.totalorder %s114, %s128
      %p130 = scmp.eq.s32.totalorder %s20, 0
      %p131 = por %p129, %p130
      %s133 = sadd.s32 %s132, 1
      %p136 = scmp.eq.s32.totalorder %s14, 7
      %p137 = scmp.ne.s32.totalorder %s132, %s134
      %p138 = scmp.eq.s32.totalorder %s14, 0
      %p139 = por %p137, %p138
      %p140 = scmp.ne.s32.totalorder %s132, %s134
      %p141 = scmp.eq.s32.totalorder %s19, 7
      %p142 = por %p140, %p141
      %p143 = scmp.ne.s32.totalorder %s134, %s135
      %p144 = scmp.eq.s32.totalorder %s19, 0
      %p145 = por %p143, %p144
      %p146 = scmp.ne.s32.totalorder %s134, %s135
      %p147 = scmp.eq.s32.totalorder %s20, 7
      %p148 = por %p146, %p147
      %p150 = scmp.ne.s32.totalorder %s135, %s149
      %p151 = scmp.eq.s32.totalorder %s20, 0
      %p152 = por %p150, %p151
      %s154 = sadd.s32 %s153, 1
      %p157 = scmp.eq.s32.totalorder %s14, 7
      %p158 = scmp.ne.s32.totalorder %s153, %s155
      %p159 = scmp.eq.s32.totalorder %s14, 0
      %p160 = por %p158, %p159
      %p161 = scmp.ne.s32.totalorder %s153, %s155
      %p162 = scmp.eq.s32.totalorder %s19, 7
      %p163 = por %p161, %p162
      %p164 = scmp.ne.s32.totalorder %s155, %s156
      %p165 = scmp.eq.s32.totalorder %s19, 0
      %p166 = por %p164, %p165
      %p167 = scmp.ne.s32.totalorder %s155, %s156
      %p168 = scmp.eq.s32.totalorder %s20, 7
      %p169 = por %p167, %p168
      %p171 = scmp.ne.s32.totalorder %s156, %s170
      %p172 = scmp.eq.s32.totalorder %s20, 0
      %p173 = por %p171, %p172
      %s174 = ssub.s32 %s21, %s33
      %s175 = ssub.s32 %s22, %s29
      %s176 = sor.u32 %s174, %s175
      %p177 = scmp.eq.s32.totalorder %s176, 0
      %s179 = sadd.s32 %s178, 1
      %s180 = scalar_select %p177, %s178, %s179
      %p183 = pneg %p177
      %p184 = scmp.eq.s32.totalorder %s14, 7
      %p185 = por %p183, %p184
      %p186 = scmp.ne.s32.totalorder %s178, %s181
      %p187 = scmp.eq.s32.totalorder %s14, 0
      %p188 = por %p186, %p187
      %p189 = scmp.ne.s32.totalorder %s178, %s181
      %p190 = scmp.eq.s32.totalorder %s19, 7
      %p191 = por %p189, %p190
      %p192 = scmp.ne.s32.totalorder %s181, %s182
      %p193 = scmp.eq.s32.totalorder %s19, 0
      %p194 = por %p192, %p193
      %p195 = scmp.ne.s32.totalorder %s181, %s182
      %p196 = scmp.eq.s32.totalorder %s20, 7
      %p197 = por %p195, %p196
      %p199 = scmp.ne.s32.totalorder %s182, %s198
      %p200 = scmp.eq.s32.totalorder %s20, 0
      %p201 = por %p199, %p200
      %s202 = ssub.s32 %s21, %s33
      %s203 = ssub.s32 %s22, %s29
      %s204 = sor.u32 %s202, %s203
      %p205 = scmp.eq.s32.totalorder %s204, 0
      %s207 = sadd.s32 %s206, 1
      %s208 = scalar_select %p205, %s206, %s207
      %p211 = pneg %p205
      %p212 = scmp.eq.s32.totalorder %s14, 7
      %p213 = por %p211, %p212
      %p214 = scmp.ne.s32.totalorder %s206, %s209
      %p215 = scmp.eq.s32.totalorder %s14, 0
      %p216 = por %p214, %p215
      %p217 = scmp.ne.s32.totalorder %s206, %s209
      %p218 = scmp.eq.s32.totalorder %s19, 7
      %p219 = por %p217, %p218
      %p220 = scmp.ne.s32.totalorder %s209, %s210
      %p221 = scmp.eq.s32.totalorder %s19, 0
      %p222 = por %p220, %p221
      %p223 = scmp.ne.s32.totalorder %s209, %s210
      %p224 = scmp.eq.s32.totalorder %s20, 7
      %p225 = por %p223, %p224
      %p227 = scmp.ne.s32.totalorder %s210, %s226
      %p228 = scmp.eq.s32.totalorder %s20, 0
      %p229 = por %p227, %p228
      %p230 = scmp.le.s32.totalorder 1, %s14
      %p231 = scmp.lt.s32.totalorder %s14, 9
      %p232 = pnand %p230, %p231
      %p233 = pneg %p232
      // Predicated region
      $region9: #{residual_unit_pallas.2} parent=5 // pred_check
        _
      $region10: #{residual_unit_pallas.2} parent=5 // pred_check_branch
        %235 = sbr.rel (%p232) target = $region12
      $region11: #{residual_unit_pallas.2} parent=5 // pred_region
        %s236 = ssub.s32 %s14, 1
        // Predicated region
        $region13: #{residual_unit_pallas.2} parent=11 // pred_check
          %p237 = pneg %p103
        $region14: #{residual_unit_pallas.2} parent=11 // pred_check_branch
          %239 = sbr.rel (%p237) target = $region16
        $region15: #{residual_unit_pallas.2} parent=11 // pred_region
          _
        $region16: #{residual_unit_pallas.2} parent=11 // pred_fallthru
          _
        // Predicated region
        $region17: #{residual_unit_pallas.2} parent=11 // pred_check
          %p240 = pneg %p124
        $region18: #{residual_unit_pallas.2} parent=11 // pred_check_branch
          %242 = sbr.rel (%p240) target = $region20
        $region19: #{residual_unit_pallas.2} parent=11 // pred_region
          _
        $region20: #{residual_unit_pallas.2} parent=11 // pred_fallthru
          _
        // Predicated region
        $region21: #{residual_unit_pallas.2} parent=11 // pred_check
          %p243 = pneg %p145
        $region22: #{residual_unit_pallas.2} parent=11 // pred_check_branch
          %245 = sbr.rel (%p243) target = $region24
        $region23: #{residual_unit_pallas.2} parent=11 // pred_region
          _
        $region24: #{residual_unit_pallas.2} parent=11 // pred_fallthru
          _
        // Predicated region
        $region25: #{residual_unit_pallas.2} parent=11 // pred_check
          %p246 = pneg %p166
        $region26: #{residual_unit_pallas.2} parent=11 // pred_check_branch
          %248 = sbr.rel (%p246) target = $region28
        $region27: #{residual_unit_pallas.2} parent=11 // pred_region
          _
        $region28: #{residual_unit_pallas.2} parent=11 // pred_fallthru
          _
      $region12: #{residual_unit_pallas.2} parent=5 // pred_fallthru
        _
      %p249 = scmp.lt.s32.totalorder %s14, 8
      // Predicated region
      $region29: #{residual_unit_pallas.2} parent=5 // pred_check
        %p250 = pneg %p249
      $region30: #{residual_unit_pallas.2} parent=5 // pred_check_branch
        %252 = sbr.rel (%p250) target = $region32
      $region31: #{residual_unit_pallas.2} parent=5 // pred_region
        // Predicated region
        $region33: #{residual_unit_pallas.2} parent=31 // pred_check
          %p253 = pneg %p48
        $region34: #{residual_unit_pallas.2} parent=31 // pred_check_branch
          %255 = sbr.rel (%p253) target = $region36
        $region35: #{residual_unit_pallas.2} parent=31 // pred_region
          %s256 = sand.u32 %s38, 1
          %s257 = sand.u32 %s38, 1
          %s258 = smul.addr %s257, 32
          %s259 = scalar_lea.vmem [#allocation2], %s258
          %s260 = smul.addr %s21, 16
          %s261 = sadd.s32 %s22, %s260
          %s262 = smul.addr %s261, 8
          %s263 = scalar_lea.vmem %s0, %s262
          // Predicated region
          $region37: #{residual_unit_pallas.2} parent=35 // pred_check
            _
          $region38: #{residual_unit_pallas.2} parent=35 // pred_check_branch
            %265 = sbr.rel (0) target = $region40
          $region39: #{residual_unit_pallas.2} parent=35 // pred_region
            // Predicated region
            $region41: #{residual_unit_pallas.2} parent=39 // pred_check
              _
            $region42: #{residual_unit_pallas.2} parent=39 // pred_check_branch
              %267 = sbr.rel (0) target = $region44
            $region43: #{residual_unit_pallas.2} parent=39 // pred_region
              // Predicated region
              $region56: #{residual_unit_pallas.2} parent=43 // pred_check
                _
              $region57: #{residual_unit_pallas.2} parent=43 // pred_check_branch
                %289 = sbr.rel (0) target = $region59
              $region58: #{residual_unit_pallas.2} parent=43 // pred_region
                loop: start=0, step=1, limit=1
                $region60: #{residual_unit_pallas.2} parent=58 // loop_pre_header
                  _
                $region61: #{residual_unit_pallas.2} parent=58 // loop_header
                  %s291 = sphi 0, %s295
                  %p292 = scmp.ge.s32.totalorder %s291, 1
                  %s296 = sphi %s263, %s263
                  %s297 = sphi %s259, %s259
                $region62: #{residual_unit_pallas.2} parent=58 // loop_header_branch
                  %294 = sbr.rel (%p292) target = $region66
                $region63: #{residual_unit_pallas.2} parent=58 // loop_body
                  %v298 = vld [vmem:[%s296] sm:$0xff]
                  %299 = vst [vmem:[%s297] sm:$0xff] %v298
                  %v300 = vld [vmem:[%s296 + $0x20] sm:$0xff]
                  %301 = vst [vmem:[%s297 + $0x8] sm:$0xff] %v300
                  %v302 = vld [vmem:[%s296 + $0x40] sm:$0xff]
                  %303 = vst [vmem:[%s297 + $0x10] sm:$0xff] %v302
                  %v304 = vld [vmem:[%s296 + $0x60] sm:$0xff]
                  %305 = vst [vmem:[%s297 + $0x18] sm:$0xff] %v304
                $region64: #{residual_unit_pallas.2} parent=58 // loop_footer
                  %s295 = sadd.s32 1, %s291
                $region65: #{residual_unit_pallas.2} parent=58 // loop_footer_branch
                  %290 = sbr.rel target = $region61
                $region66: #{residual_unit_pallas.2} parent=58 // loop_exit
                  _
              $region59: #{residual_unit_pallas.2} parent=43 // pred_fallthru
                _
              // Predicated region
              $region67: #{residual_unit_pallas.2} parent=43 // pred_check
                _
              $region68: #{residual_unit_pallas.2} parent=43 // pred_check_branch
                %307 = sbr.rel target = $region70
              $region69: #{residual_unit_pallas.2} parent=43 // pred_region
                _
              $region70: #{residual_unit_pallas.2} parent=43 // pred_fallthru
                _
            $region44: #{residual_unit_pallas.2} parent=39 // pred_fallthru
              _
            // Predicated region
            $region45: #{residual_unit_pallas.2} parent=39 // pred_check
              _
            $region46: #{residual_unit_pallas.2} parent=39 // pred_check_branch
              %269 = sbr.rel target = $region48
            $region47: #{residual_unit_pallas.2} parent=39 // pred_region
              %s271 = ssub.s32 256, 1
              loop: start=0, step=1, limit=1
              $region49: #{residual_unit_pallas.2} parent=47 // loop_pre_header
                _
              $region50: #{residual_unit_pallas.2} parent=47 // loop_header
                %s273 = sphi 0, %s277
                %p274 = scmp.ge.s32.totalorder %s273, 1
                %s278 = sphi %s263, %s263
                %s279 = sphi %s259, %s259
              $region51: #{residual_unit_pallas.2} parent=47 // loop_header_branch
                %276 = sbr.rel (%p274) target = $region55
              $region52: #{residual_unit_pallas.2} parent=47 // loop_body
                %v280 = vld [vmem:[%s278] sm:%s271]
                %281 = vst [vmem:[%s279] sm:%s271] %v280
                %v282 = vld [vmem:[%s278 + $0x20] sm:%s271]
                %283 = vst [vmem:[%s279 + $0x8] sm:%s271] %v282
                %v284 = vld [vmem:[%s278 + $0x40] sm:%s271]
                %285 = vst [vmem:[%s279 + $0x10] sm:%s271] %v284
                %v286 = vld [vmem:[%s278 + $0x60] sm:%s271]
                %287 = vst [vmem:[%s279 + $0x18] sm:%s271] %v286
              $region53: #{residual_unit_pallas.2} parent=47 // loop_footer
                %s277 = sadd.s32 1, %s273
              $region54: #{residual_unit_pallas.2} parent=47 // loop_footer_branch
                %272 = sbr.rel target = $region50
              $region55: #{residual_unit_pallas.2} parent=47 // loop_exit
                _
            $region48: #{residual_unit_pallas.2} parent=39 // pred_fallthru
              _
          $region40: #{residual_unit_pallas.2} parent=35 // pred_fallthru
            _
          %308 = vnop
        $region36: #{residual_unit_pallas.2} parent=31 // pred_fallthru
          _
        // Predicated region
        $region71: #{residual_unit_pallas.2} parent=31 // pred_check
          %p309 = pneg %p76
        $region72: #{residual_unit_pallas.2} parent=31 // pred_check_branch
          %311 = sbr.rel (%p309) target = $region74
        $region73: #{residual_unit_pallas.2} parent=31 // pred_region
          %p312 = scmp.lt.s32.totalorder %s21, 1
          %s313 = scalar_select %p312, %s21, 1
          %p314 = scmp.lt.s32.totalorder %s22, 3
          %s315 = scalar_select %p314, %s22, 3
          %s316 = smul.addr %s315, 4
          %s317 = smul.addr %s313, 16
          %s318 = sadd.s32 %s316, %s317
          %s319 = smul.addr %s318, 8
          %s320 = scalar_lea.vmem %s1, %s319
        $region74: #{residual_unit_pallas.2} parent=31 // pred_fallthru
          _
      $region32: #{residual_unit_pallas.2} parent=5 // pred_fallthru
        _
      %p321 = scmp.le.s32.totalorder 1, %s14
      %p322 = scmp.lt.s32.totalorder %s14, 9
      %p323 = pnand %p321, %p322
      %p324 = pneg %p323
      // Predicated region
      $region75: #{residual_unit_pallas.2} parent=5 // pred_check
        _
      $region76: #{residual_unit_pallas.2} parent=5 // pred_check_branch
        %326 = sbr.rel (%p323) target = $region78
      $region77: #{residual_unit_pallas.2} parent=5 // pred_region
        %s327 = ssub.s32 %s14, 1
        %s328 = sand.u32 %s41, 1
        %s329 = sand.u32 %s41, 1
        %s330 = smul.addr %s329, 32
        %s331 = scalar_lea.vmem [#allocation2], %s330
        // Predicated region
        $region79: #{residual_unit_pallas.2} parent=77 // pred_check
          %p332 = pneg %p54
        $region80: #{residual_unit_pallas.2} parent=77 // pred_check_branch
          %334 = sbr.rel (%p332) target = $region82
        $region81: #{residual_unit_pallas.2} parent=77 // pred_region
          _
        $region82: #{residual_unit_pallas.2} parent=77 // pred_fallthru
          _
        %s335 = sand.u32 %s41, 1
        %s336 = sand.u32 %s41, 1
        %s337 = smul.addr %s336, 32
        %s338 = scalar_lea.vmem [#allocation2], %s337
        %p339 = pneg %p54
        %p340 = pneg %p51
        %p341 = scmp.lt.s32.totalorder %s23, 1
        %s342 = scalar_select %p341, %s23, 1
        %p343 = scmp.lt.s32.totalorder %s24, 3
        %s344 = scalar_select %p343, %s24, 3
        %s345 = smul.addr %s344, 4
        %s346 = smul.addr %s342, 16
        %s347 = sadd.s32 %s345, %s346
        %s348 = smul.addr %s347, 8
        %s349 = scalar_lea.vmem %s1, %s348
        %p350 = pneg %p82
        %p351 = pneg %p79
        %p352 = pneg %p103
        %p353 = pneg %p100
        %p354 = pneg %p124
        %p355 = pneg %p121
        %p356 = pneg %p145
        %p357 = pneg %p142
        %p358 = pneg %p166
        %p359 = pneg %p163
        %p360 = pneg %p194
        %p361 = pneg %p191
        %s362 = sand.u32 %s181, 1
        %s363 = sand.u32 %s181, 1
        %s364 = smul.addr %s363, 32
        %s365 = scalar_lea.vmem [#allocation3], %s364
        %p366 = pneg %p222
        %p367 = pneg %p219
        %p368 = scmp.lt.s32.totalorder %s23, 1
        %s369 = scalar_select %p368, %s23, 1
        %p370 = scmp.lt.s32.totalorder %s24, 3
        %s371 = scalar_select %p370, %s24, 3
        %s372 = smul.addr %s371, 4
        %s373 = smul.addr %s369, 16
        %s374 = sadd.s32 %s372, %s373
        %s375 = smul.addr %s374, 8
        %s376 = scalar_lea.vmem %s7, %s375
        %p377 = scmp.lt.s32.totalorder %s23, 1
        %s378 = scalar_select %p377, %s23, 1
        %p379 = scmp.lt.s32.totalorder %s24, 3
        %s380 = scalar_select %p379, %s24, 3
        %s381 = smul.addr %s380, 4
        %s382 = smul.addr %s378, 16
        %s383 = sadd.s32 %s381, %s382
        %s384 = smul.addr %s383, 8
        %s385 = scalar_lea.vmem %s1, %s384
        %p386 = scmp.lt.s32.totalorder %s23, 1
        %s387 = scalar_select %p386, %s23, 1
        %p388 = scmp.lt.s32.totalorder %s24, 3
        %s389 = scalar_select %p388, %s24, 3
        %s390 = smul.addr %s389, 4
        %s391 = smul.addr %s387, 16
        %s392 = sadd.s32 %s390, %s391
        %s393 = smul.addr %s392, 8
        %s394 = scalar_lea.vmem %s7, %s393
        %v396 = vld [vmem:[%s331] sm:$0xff]
        %v397 = vld [vmem:[%s331 + $0x8] sm:$0xff]
        %v398 = vld [vmem:[%s331 + $0x10] sm:$0xff]
        %v399 = vld [vmem:[%s331 + $0x18] sm:$0xff]
        %v400 = vld [vmem:[%s385] sm:$0xff]
        %v401 = vld [vmem:[%s385 + $0x8] sm:$0xff]
        %v402 = vld [vmem:[%s385 + $0x10] sm:$0xff]
        %v403 = vld [vmem:[%s385 + $0x18] sm:$0xff]
        %v404 = vld [vmem:[%s2] sm:$0xff]
        %v405 = vld [vmem:[%s2 + $0x8] sm:$0xff]
        %v406 = vld [vmem:[%s2 + $0x10] sm:$0xff]
        %v407 = vld [vmem:[%s2 + $0x18] sm:$0xff]
        %v408 = vld [vmem:[%s3] sm:$0xff]
        %v409 = vld [vmem:[%s3 + $0x8] sm:$0xff]
        %v410 = vld [vmem:[%s3 + $0x10] sm:$0xff]
        %v411 = vld [vmem:[%s3 + $0x18] sm:$0xff]
        %v412 = vld [vmem:[%s4] sm:$0xf]
        %v413 = vld [vmem:[%s4 + $0x4] sm:$0xf]
        %v414 = vld [vmem:[%s4 + $0x8] sm:$0xf]
        %v415 = vld [vmem:[%s4 + $0xc] sm:$0xf]
        %417 = vset.pattern.permute.xlu0 0
        %418 = vperm.xlu0 %417, %v404
        %v419 = vpop.permute.xlu0 %418
        %422 = vset.pattern.permute.xlu0 0
        %423 = vperm.xlu0 %422, %v405
        %v424 = vpop.permute.xlu0 %423
        %427 = vset.pattern.permute.xlu0 0
        %428 = vperm.xlu0 %427, %v406
        %v429 = vpop.permute.xlu0 %428
        %432 = vset.pattern.permute.xlu0 0
        %433 = vperm.xlu0 %432, %v407
        %v434 = vpop.permute.xlu0 %433
        %v436 = vmul.f32 %v396, %v419
        %v437 = vmul.f32 %v397, %v424
        %v438 = vmul.f32 %v398, %v429
        %v439 = vmul.f32 %v399, %v434
        %441 = vset.pattern.permute.xlu0 0
        %442 = vperm.xlu0 %441, %v408
        %v443 = vpop.permute.xlu0 %442
        %446 = vset.pattern.permute.xlu0 0
        %447 = vperm.xlu0 %446, %v409
        %v448 = vpop.permute.xlu0 %447
        %451 = vset.pattern.permute.xlu0 0
        %452 = vperm.xlu0 %451, %v410
        %v453 = vpop.permute.xlu0 %452
        %456 = vset.pattern.permute.xlu0 0
        %457 = vperm.xlu0 %456, %v411
        %v458 = vpop.permute.xlu0 %457
        %v460 = vadd.f32 %v436, %v443
        %v461 = vadd.f32 %v437, %v448
        %v462 = vadd.f32 %v438, %v453
        %v463 = vadd.f32 %v439, %v458
        %vm464 = vcmp.gt.f32.partialorder %v460, 0.0
        %vm465 = vcmp.gt.f32.partialorder %v461, 0.0
        %vm466 = vcmp.gt.f32.partialorder %v462, 0.0
        %vm467 = vcmp.gt.f32.partialorder %v463, 0.0
        %v468 = vmul.f32 %v460, 0.1
        %v469 = vmul.f32 %v461, 0.1
        %v470 = vmul.f32 %v462, 0.1
        %v471 = vmul.f32 %v463, 0.1
        %v472 = vsel %vm464, %v460, %v468
        %v473 = vsel %vm465, %v461, %v469
        %v474 = vsel %vm466, %v462, %v470
        %v475 = vsel %vm467, %v463, %v471
        %v476 = vmul.f32 %v400, %v419
        %v477 = vmul.f32 %v401, %v424
        %v478 = vmul.f32 %v402, %v429
        %v479 = vmul.f32 %v403, %v434
        %v480 = vadd.f32 %v476, %v443
        %v481 = vadd.f32 %v477, %v448
        %v482 = vadd.f32 %v478, %v453
        %v483 = vadd.f32 %v479, %v458
        %vm484 = vcmp.gt.f32.partialorder %v480, 0.0
        %vm485 = vcmp.gt.f32.partialorder %v481, 0.0
        %vm486 = vcmp.gt.f32.partialorder %v482, 0.0
        %vm487 = vcmp.gt.f32.partialorder %v483, 0.0
        %v488 = vmul.f32 %v480, 0.1
        %v489 = vmul.f32 %v481, 0.1
        %v490 = vmul.f32 %v482, 0.1
        %v491 = vmul.f32 %v483, 0.1
        %v492 = vsel %vm484, %v480, %v488
        %v493 = vsel %vm485, %v481, %v489
        %v494 = vsel %vm486, %v482, %v490
        %v495 = vsel %vm487, %v483, %v491
        %p496 = scmp.gt.s32.totalorder %s24, 0
        %s497 = scalar_select %p496, 1, 0
        %s498 = scvt.s32.f32 %s497
        %p499 = scmp.lt.s32.totalorder %s24, 3
        %s500 = scalar_select %p499, 1, 0
        %s501 = scvt.s32.f32 %s500
        %v502 = vstv %s498
        %v503 = vmul.f32 %v492, %v502
        %v504 = vmul.f32 %v493, %v502
        %v505 = vmul.f32 %v494, %v502
        %v506 = vmul.f32 %v495, %v502
        %v507 = vstv %s501
        %v508 = vmul.f32 %v492, %v507
        %v509 = vmul.f32 %v493, %v507
        %v510 = vmul.f32 %v494, %v507
        %v511 = vmul.f32 %v495, %v507
        %516 = vrot.lane.b32.xlu0 %v472, 2
        %v517 = vpop.permute.xlu0 %516
        %518 = vrot.lane.b32.xlu0 %v473, 2
        %v519 = vpop.permute.xlu0 %518
        %520 = vrot.lane.b32.xlu0 %v474, 2
        %v521 = vpop.permute.xlu0 %520
        %522 = vrot.lane.b32.xlu0 %v475, 2
        %v523 = vpop.permute.xlu0 %522
        %vm528 = vcmask 15360
        %v529 = vsel %vm528, %v503, %v517
        %v530 = vsel %vm528, %v504, %v519
        %v531 = vsel %vm528, %v505, %v521
        %v532 = vsel %vm528, %v506, %v523
        %v533 = vsel %vm528, %v517, %v508
        %v534 = vsel %vm528, %v519, %v509
        %v535 = vsel %vm528, %v521, %v510
        %v536 = vsel %vm528, %v523, %v511
        %545 = vrot.lane.b32.xlu0 %v529, 126
        %v546 = vpop.permute.xlu0 %545
        %547 = vrot.lane.b32.xlu0 %v533, 126
        %v548 = vpop.permute.xlu0 %547
        %549 = vrot.lane.b32.xlu0 %v530, 126
        %v550 = vpop.permute.xlu0 %549
        %551 = vrot.lane.b32.xlu0 %v534, 126
        %v552 = vpop.permute.xlu0 %551
        %553 = vrot.lane.b32.xlu0 %v531, 126
        %v554 = vpop.permute.xlu0 %553
        %555 = vrot.lane.b32.xlu0 %v535, 126
        %v556 = vpop.permute.xlu0 %555
        %557 = vrot.lane.b32.xlu0 %v532, 126
        %v558 = vpop.permute.xlu0 %557
        %559 = vrot.lane.b32.xlu0 %v536, 126
        %v560 = vpop.permute.xlu0 %559
        %vm561 = vcmask 1031168
        %v562 = vsel %vm561, %v546, %v548
        %v563 = vsel %vm561, %v550, %v552
        %v564 = vsel %vm561, %v554, %v556
        %v565 = vsel %vm561, %v558, %v560
        %570 = vrot.lane.b32.xlu0 %v529, 124
        %v571 = vpop.permute.xlu0 %570
        %572 = vrot.lane.b32.xlu0 %v533, 124
        %v573 = vpop.permute.xlu0 %572
        %574 = vrot.lane.b32.xlu0 %v530, 124
        %v575 = vpop.permute.xlu0 %574
        %576 = vrot.lane.b32.xlu0 %v534, 124
        %v577 = vpop.permute.xlu0 %576
        %578 = vrot.lane.b32.xlu0 %v531, 124
        %v579 = vpop.permute.xlu0 %578
        %580 = vrot.lane.b32.xlu0 %v535, 124
        %v581 = vpop.permute.xlu0 %580
        %582 = vrot.lane.b32.xlu0 %v532, 124
        %v583 = vpop.permute.xlu0 %582
        %584 = vrot.lane.b32.xlu0 %v536, 124
        %v585 = vpop.permute.xlu0 %584
        %vm586 = vcmask 1014784
        %v587 = vsel %vm586, %v571, %v573
        %v588 = vsel %vm586, %v575, %v577
        %v589 = vsel %vm586, %v579, %v581
        %v590 = vsel %vm586, %v583, %v585
        %v595 = vpack.c.bf16 %v530, %v529
        %v596 = vpack.c.bf16 %v532, %v531
        %v597 = vpack.c.bf16 %v563, %v562
        %v598 = vpack.c.bf16 %v565, %v564
        %v599 = vpack.c.bf16 %v588, %v587
        %v600 = vpack.c.bf16 %v590, %v589
        %v601 = vld [vmem:[%s5] sm:$0xff]
        %v602 = vld [vmem:[%s5 + $0x8] sm:$0xff]
        %v603 = vld [vmem:[%s5 + $0x10] sm:$0xff]
        %v604 = vld [vmem:[%s5 + $0x18] sm:$0xff]
        %606 = vset.pattern.permute.xlu0 0
        %607 = vperm.xlu0 %606, %v601
        %v608 = vpop.permute.xlu0 %607
        %611 = vset.pattern.permute.xlu0 0
        %612 = vperm.xlu0 %611, %v602
        %v613 = vpop.permute.xlu0 %612
        %616 = vset.pattern.permute.xlu0 0
        %617 = vperm.xlu0 %616, %v603
        %v618 = vpop.permute.xlu0 %617
        %621 = vset.pattern.permute.xlu0 0
        %622 = vperm.xlu0 %621, %v604
        %v623 = vpop.permute.xlu0 %622
        %v629 = vunpack.c.l.b16 %v412
        %v630 = vunpack.c.l.b16 %v413
        %v631 = vunpack.c.l.b16 %v414
        %v632 = vunpack.c.l.b16 %v415
        %v633 = vpack.c.b16 %v630, %v629
        %v634 = vpack.c.b16 %v632, %v631
        %vm635 = vcmask 785408
        %v637 = vsel %vm635, %v633, 0
        %v640 = vsel %vm635, %v634, 0
        %642 = vmatpush.bf16.msra.mxu0 0
        %643 = vmatpush.bf16.msra.mxu0 0
        %644 = vmatpush.bf16.msra.mxu0 %v600
        %645 = vmatpush.bf16.msra.mxu0 %v599
        %646 = vmatpush.bf16.msra.mxu0 %v598
        %647 = vmatpush.bf16.msra.mxu0 %v597
        %648 = vmatpush.bf16.msra.mxu0 %v596
        %649 = vmatpush.bf16.msra.mxu0 %v595
        %650 = vmatmul.bf16.gmra.mxu0 %v637
        %v651 = vpop.f32.mrf.mxu0
        %v652 = vadd.f32 %v608, %v651
        %v653 = vpop.f32.mrf.mxu0
        %v654 = vadd.f32 %v613, %v653
        %655 = vmatmul.bf16.gmra.mxu0 %v640
        %v656 = vpop.f32.mrf.mxu0
        %v657 = vadd.f32 %v618, %v656
        %v658 = vpop.f32.mrf.mxu0
        %v659 = vadd.f32 %v623, %v658
        %660 = vdwg.mxu0
        %661 = vst [vmem:[%s365] sm:$0xff] %v652
        %662 = vst [vmem:[%s365 + $0x8] sm:$0xff] %v654
        %663 = vst [vmem:[%s365 + $0x10] sm:$0xff] %v657
        %664 = vst [vmem:[%s365 + $0x18] sm:$0xff] %v659
        %665 = vadd.xlane.f32.xlu0 %v652
        %v666 = vpop.xlane.xlu0 %665
        %667 = vadd.xlane.f32.xlu0 %v654
        %v668 = vpop.xlane.xlu0 %667
        %669 = vadd.xlane.f32.xlu0 %v657
        %v670 = vpop.xlane.xlu0 %669
        %671 = vadd.xlane.f32.xlu0 %v659
        %v672 = vpop.xlane.xlu0 %671
        %v673 = vmul.f32 %v652, %v652
        %v674 = vmul.f32 %v654, %v654
        %v675 = vmul.f32 %v657, %v657
        %v676 = vmul.f32 %v659, %v659
        %677 = vadd.xlane.f32.xlu0 %v673
        %v678 = vpop.xlane.xlu0 %677
        %679 = vadd.xlane.f32.xlu0 %v674
        %v680 = vpop.xlane.xlu0 %679
        %681 = vadd.xlane.f32.xlu0 %v675
        %v682 = vpop.xlane.xlu0 %681
        %683 = vadd.xlane.f32.xlu0 %v676
        %v684 = vpop.xlane.xlu0 %683
        %vm685 = vcmask 7168
        %v686 = vsel %vm685, %v666, %v678
        %v687 = vsel %vm685, %v668, %v680
        %v688 = vsel %vm685, %v670, %v682
        %v689 = vsel %vm685, %v672, %v684
        %690 = vst.msk [vmem:[%s394] sm:$0xff] %vm528, %v686
        %691 = vst.msk [vmem:[%s394 + $0x8] sm:$0xff] %vm528, %v687
        %692 = vst.msk [vmem:[%s394 + $0x10] sm:$0xff] %vm528, %v688
        %693 = vst.msk [vmem:[%s394 + $0x18] sm:$0xff] %vm528, %v689
        %s694 = sand.u32 %s181, 1
        %s695 = sand.u32 %s181, 1
        %s696 = smul.addr %s695, 32
        %s697 = scalar_lea.vmem [#allocation3], %s696
        %p698 = scmp.lt.s32.totalorder %s23, 1
        %s699 = scalar_select %p698, %s23, 1
        %p700 = scmp.lt.s32.totalorder %s24, 3
        %s701 = scalar_select %p700, %s24, 3
        %s702 = smul.addr %s701, 4
        %s703 = smul.addr %s699, 16
        %s704 = sadd.s32 %s702, %s703
        %s705 = smul.addr %s704, 8
        %s706 = scalar_lea.vmem %s7, %s705
        // Predicated region
        $region83: #{residual_unit_pallas.2} parent=77 // pred_check
          %p707 = pneg %p191
        $region84: #{residual_unit_pallas.2} parent=77 // pred_check_branch
          %709 = sbr.rel (%p707) target = $region86
        $region85: #{residual_unit_pallas.2} parent=77 // pred_region
          %s710 = smul.addr %s23, 16
          %s711 = sadd.s32 %s24, %s710
          %s712 = smul.addr %s711, 8
          %s713 = scalar_lea.vmem %s6, %s712
          // Predicated region
          $region87: #{residual_unit_pallas.2} parent=85 // pred_check
            _
          $region88: #{residual_unit_pallas.2} parent=85 // pred_check_branch
            %715 = sbr.rel (0) target = $region90
          $region89: #{residual_unit_pallas.2} parent=85 // pred_region
            // Predicated region
            $region91: #{residual_unit_pallas.2} parent=89 // pred_check
              _
            $region92: #{residual_unit_pallas.2} parent=89 // pred_check_branch
              %717 = sbr.rel (0) target = $region94
            $region93: #{residual_unit_pallas.2} parent=89 // pred_region
              // Predicated region
              $region106: #{residual_unit_pallas.2} parent=93 // pred_check
                _
              $region107: #{residual_unit_pallas.2} parent=93 // pred_check_branch
                %739 = sbr.rel (0) target = $region109
              $region108: #{residual_unit_pallas.2} parent=93 // pred_region
                loop: start=0, step=1, limit=1
                $region110: #{residual_unit_pallas.2} parent=108 // loop_pre_header
                  _
                $region111: #{residual_unit_pallas.2} parent=108 // loop_header
                  %s741 = sphi 0, %s745
                  %p742 = scmp.ge.s32.totalorder %s741, 1
                  %s746 = sphi %s697, %s697
                  %s747 = sphi %s713, %s713
                $region112: #{residual_unit_pallas.2} parent=108 // loop_header_branch
                  %744 = sbr.rel (%p742) target = $region116
                $region113: #{residual_unit_pallas.2} parent=108 // loop_body
                  %v748 = vld [vmem:[%s746] sm:$0xff]
                  %749 = vst [vmem:[%s747] sm:$0xff] %v748
                  %v750 = vld [vmem:[%s746 + $0x8] sm:$0xff]
                  %751 = vst [vmem:[%s747 + $0x20] sm:$0xff] %v750
                  %v752 = vld [vmem:[%s746 + $0x10] sm:$0xff]
                  %753 = vst [vmem:[%s747 + $0x40] sm:$0xff] %v752
                  %v754 = vld [vmem:[%s746 + $0x18] sm:$0xff]
                  %755 = vst [vmem:[%s747 + $0x60] sm:$0xff] %v754
                $region114: #{residual_unit_pallas.2} parent=108 // loop_footer
                  %s745 = sadd.s32 1, %s741
                $region115: #{residual_unit_pallas.2} parent=108 // loop_footer_branch
                  %740 = sbr.rel target = $region111
                $region116: #{residual_unit_pallas.2} parent=108 // loop_exit
                  _
              $region109: #{residual_unit_pallas.2} parent=93 // pred_fallthru
                _
              // Predicated region
              $region117: #{residual_unit_pallas.2} parent=93 // pred_check
                _
              $region118: #{residual_unit_pallas.2} parent=93 // pred_check_branch
                %757 = sbr.rel target = $region120
              $region119: #{residual_unit_pallas.2} parent=93 // pred_region
                _
              $region120: #{residual_unit_pallas.2} parent=93 // pred_fallthru
                _
            $region94: #{residual_unit_pallas.2} parent=89 // pred_fallthru
              _
            // Predicated region
            $region95: #{residual_unit_pallas.2} parent=89 // pred_check
              _
            $region96: #{residual_unit_pallas.2} parent=89 // pred_check_branch
              %719 = sbr.rel target = $region98
            $region97: #{residual_unit_pallas.2} parent=89 // pred_region
              %s721 = ssub.s32 256, 1
              loop: start=0, step=1, limit=1
              $region99: #{residual_unit_pallas.2} parent=97 // loop_pre_header
                _
              $region100: #{residual_unit_pallas.2} parent=97 // loop_header
                %s723 = sphi 0, %s727
                %p724 = scmp.ge.s32.totalorder %s723, 1
                %s728 = sphi %s697, %s697
                %s729 = sphi %s713, %s713
              $region101: #{residual_unit_pallas.2} parent=97 // loop_header_branch
                %726 = sbr.rel (%p724) target = $region105
              $region102: #{residual_unit_pallas.2} parent=97 // loop_body
                %v730 = vld [vmem:[%s728] sm:%s721]
                %731 = vst [vmem:[%s729] sm:%s721] %v730
                %v732 = vld [vmem:[%s728 + $0x8] sm:%s721]
                %733 = vst [vmem:[%s729 + $0x20] sm:%s721] %v732
                %v734 = vld [vmem:[%s728 + $0x10] sm:%s721]
                %735 = vst [vmem:[%s729 + $0x40] sm:%s721] %v734
                %v736 = vld [vmem:[%s728 + $0x18] sm:%s721]
                %737 = vst [vmem:[%s729 + $0x60] sm:%s721] %v736
              $region103: #{residual_unit_pallas.2} parent=97 // loop_footer
                %s727 = sadd.s32 1, %s723
              $region104: #{residual_unit_pallas.2} parent=97 // loop_footer_branch
                %722 = sbr.rel target = $region100
              $region105: #{residual_unit_pallas.2} parent=97 // loop_exit
                _
            $region98: #{residual_unit_pallas.2} parent=89 // pred_fallthru
              _
          $region90: #{residual_unit_pallas.2} parent=85 // pred_fallthru
            _
          %758 = vnop
        $region86: #{residual_unit_pallas.2} parent=77 // pred_fallthru
          _
        // Predicated region
        $region121: #{residual_unit_pallas.2} parent=77 // pred_check
          %p759 = pneg %p219
        $region122: #{residual_unit_pallas.2} parent=77 // pred_check_branch
          %761 = sbr.rel (%p759) target = $region124
        $region123: #{residual_unit_pallas.2} parent=77 // pred_region
          _
        $region124: #{residual_unit_pallas.2} parent=77 // pred_fallthru
          _
      $region78: #{residual_unit_pallas.2} parent=5 // pred_fallthru
        _
      %p762 = scmp.le.s32.totalorder 2, %s14
      // Predicated region
      $region125: #{residual_unit_pallas.2} parent=5 // pred_check
        %p763 = pneg %p762
      $region126: #{residual_unit_pallas.2} parent=5 // pred_check_branch
        %765 = sbr.rel (%p763) target = $region128
      $region127: #{residual_unit_pallas.2} parent=5 // pred_region
        %s766 = ssub.s32 %s14, 2
        // Predicated region
        $region129: #{residual_unit_pallas.2} parent=127 // pred_check
          %p767 = pneg %p197
        $region130: #{residual_unit_pallas.2} parent=127 // pred_check_branch
          %769 = sbr.rel (%p767) target = $region132
        $region131: #{residual_unit_pallas.2} parent=127 // pred_region
          %s770 = sand.u32 %s182, 1
          %s771 = sand.u32 %s182, 1
          %s772 = smul.addr %s771, 32
          %s773 = scalar_lea.vmem [#allocation3], %s772
        $region132: #{residual_unit_pallas.2} parent=127 // pred_fallthru
          _
        // Predicated region
        $region133: #{residual_unit_pallas.2} parent=127 // pred_check
          %p774 = pneg %p225
        $region134: #{residual_unit_pallas.2} parent=127 // pred_check_branch
          %776 = sbr.rel (%p774) target = $region136
        $region135: #{residual_unit_pallas.2} parent=127 // pred_region
          %p777 = scmp.lt.s32.totalorder %s25, 1
          %s778 = scalar_select %p777, %s25, 1
          %p779 = scmp.lt.s32.totalorder %s26, 3
          %s780 = scalar_select %p779, %s26, 3
          %s781 = smul.addr %s780, 4
          %s782 = smul.addr %s778, 16
          %s783 = sadd.s32 %s781, %s782
          %s784 = smul.addr %s783, 8
          %s785 = scalar_lea.vmem %s7, %s784
        $region136: #{residual_unit_pallas.2} parent=127 // pred_fallthru
          _
      $region128: #{residual_unit_pallas.2} parent=5 // pred_fallthru
        _
    $region6: #{residual_unit_pallas.2} parent=1 // loop_footer
      %s18 = sadd.s32 1, %s14
    $region7: #{residual_unit_pallas.2} parent=1 // loop_footer_branch
      %13 = sbr.rel target = $region3
    $region8: #{residual_unit_pallas.2} parent=1 // loop_exit
      _

// kernel: residual_unit_pallas.3
$region0: #{residual_unit_pallas.3}
  #allocation0 [shape = 'u32[]', space=smem, size = 0x4, offset = 0x4, fixed_abs, tag = 'smem constant byte address 0x4 - core index']
  #allocation1 [shape = 'u32[72,128]{1,0:T(1,128)}', space=vmem, size = 0x9000, scoped, tag = 'internal scratch']
  %s0 = inlined_call_operand.vmem [shape: f32[2,32,512], index: 0, kind: input, shape index: {}]
  %s1 = inlined_call_operand.vmem [shape: f32[2,4,32,4], index: 1, kind: input, shape index: {}]
  %s2 = inlined_call_operand.vmem [shape: f32[2,32,512], index: 2, kind: input, shape index: {}]
  %s3 = inlined_call_operand.vmem [shape: f32[32,1], index: 3, kind: input, shape index: {}]
  %s4 = inlined_call_operand.vmem [shape: f32[32,1], index: 4, kind: input, shape index: {}]
  %s5 = inlined_call_operand.vmem [shape: bf16[32,96], index: 5, kind: input, shape index: {}]
  %s6 = inlined_call_operand.vmem [shape: f32[32,1], index: 6, kind: input, shape index: {}]
  %s7 = inlined_call_operand.hbm [shape: f32[2,32,512], index: 7, kind: output, shape index: {}]
  %s8 = sld [smem:[#allocation0]]
  $region137: #{residual_unit_pallas.3} parent=0
    _
  %s10 = ssub.s32 1, %s8
  %s11 = scalar_select 0, %s10, %s8
  $region1: #{residual_unit_pallas.3} parent=0
    #allocation2 [shape = 'u8[32768]{0}', space=vmem, size = 0x8000, scoped, tag = 'input window, operand 0']
    #allocation3 [shape = 'u8[32768]{0}', space=vmem, size = 0x8000, scoped, tag = 'input window, operand 2']
    #allocation4 [shape = 'u8[32768]{0}', space=vmem, size = 0x8000, scoped, tag = 'output window, operand 0']
    #allocation5 [shape = 's32[2]{0}', space=sflag, size = 0x8, scoped, tag = 'scoped memory for residual_unit_pallas.3']
    %12 = vsyncpa [#allocation5], 0
    %s13 = scalar_lea.sflag [#allocation5], 1
    %14 = vsyncpa %s13, 0
    loop: start=0, step=1, limit=10
    $region2: #{residual_unit_pallas.3} parent=1 // loop_pre_header
      _
    $region3: #{residual_unit_pallas.3} parent=1 // loop_header
      %s16 = sphi 0, %s20
      %p17 = scmp.ge.s32.totalorder %s16, 10
      %s23 = sphi 0, %s35
      %s24 = sphi 0, %s31
      %s25 = sphi 0, %s23
      %s26 = sphi 0, %s24
      %s27 = sphi 0, %s25
      %s28 = sphi 0, %s26
      %s40 = sphi 0, %s42
      %s43 = sphi 0, %s40
      %s44 = sphi 0, %s43
      %s60 = sphi 0, %s44
      %s68 = sphi 0, %s70
      %s71 = sphi 0, %s68
      %s72 = sphi 0, %s71
      %s88 = sphi 0, %s72
      %s96 = sphi 0, %s98
      %s99 = sphi 0, %s96
      %s100 = sphi 0, %s99
      %s116 = sphi 0, %s100
      %s120 = sphi 0, %s120
      %s122 = sphi 0, %s120
      %s123 = sphi 0, %s122
      %s137 = sphi 0, %s123
      %s141 = sphi 0, %s141
      %s143 = sphi 0, %s141
      %s144 = sphi 0, %s143
      %s158 = sphi 0, %s144
      %s162 = sphi 0, %s162
      %s164 = sphi 0, %s162
      %s165 = sphi 0, %s164
      %s179 = sphi 0, %s165
      %s183 = sphi 0, %s183
      %s185 = sphi 0, %s183
      %s186 = sphi 0, %s185
      %s200 = sphi 0, %s186
      %s208 = sphi 0, %s210
      %s211 = sphi 0, %s208
      %s212 = sphi 0, %s211
      %s228 = sphi 0, %s212
    $region4: #{residual_unit_pallas.3} parent=1 // loop_header_branch
      %19 = sbr.rel (%p17) target = $region8
    $region5: #{residual_unit_pallas.3} parent=1 // loop_body
      %s21 = ssub.s32 %s16, 1
      %s22 = ssub.s32 %s16, 2
      %s29 = sadd.s32 1, %s24
      %p30 = scmp.ge.s32.totalorder %s29, 4
      %s31 = scalar_select %p30, 0, %s29
      %s32 = sadd.s32 1, %s23
      %s33 = scalar_select %p30, %s32, %s23
      %p34 = scmp.ge.s32.totalorder %s33, 2
      %s35 = scalar_select %p34, 0, %s33
      %s36 = ssub.s32 %s23, %s35
      %s37 = ssub.s32 %s24, %s31
      %s38 = sor.u32 %s36, %s37
      %p39 = scmp.eq.s32.totalorder %s38, 0
      %s41 = sadd.s32 %s40, 1
      %s42 = scalar_select %p39, %s40, %s41
      %p45 = pneg %p39
      %p46 = scmp.eq.s32.totalorder %s16, 7
      %p47 = por %p45, %p46
      %p48 = scmp.ne.s32.totalorder %s40, %s43
      %p49 = scmp.eq.s32.totalorder %s16, 0
      %p50 = por %p48, %p49
      %p51 = scmp.ne.s32.totalorder %s40, %s43
      %p52 = scmp.eq.s32.totalorder %s21, 7
      %p53 = por %p51, %p52
      %p54 = scmp.ne.s32.totalorder %s43, %s44
      %p55 = scmp.eq.s32.totalorder %s21, 0
      %p56 = por %p54, %p55
      %p57 = scmp.ne.s32.totalorder %s43, %s44
      %p58 = scmp.eq.s32.totalorder %s22, 7
      %p59 = por %p57, %p58
      %p61 = scmp.ne.s32.totalorder %s44, %s60
      %p62 = scmp.eq.s32.totalorder %s22, 0
      %p63 = por %p61, %p62
      %s64 = ssub.s32 %s23, %s35
      %s65 = ssub.s32 %s24, %s31
      %s66 = sor.u32 %s64, %s65
      %p67 = scmp.eq.s32.totalorder %s66, 0
      %s69 = sadd.s32 %s68, 1
      %s70 = scalar_select %p67, %s68, %s69
      %p73 = pneg %p67
      %p74 = scmp.eq.s32.totalorder %s16, 7
      %p75 = por %p73, %p74
      %p76 = scmp.ne.s32.totalorder %s68, %s71
      %p77 = scmp.eq.s32.totalorder %s16, 0
      %p78 = por %p76, %p77
      %p79 = scmp.ne.s32.totalorder %s68, %s71
      %p80 = scmp.eq.s32.totalorder %s21, 7
      %p81 = por %p79, %p80
      %p82 = scmp.ne.s32.totalorder %s71, %s72
      %p83 = scmp.eq.s32.totalorder %s21, 0
      %p84 = por %p82, %p83
      %p85 = scmp.ne.s32.totalorder %s71, %s72
      %p86 = scmp.eq.s32.totalorder %s22, 7
      %p87 = por %p85, %p86
      %p89 = scmp.ne.s32.totalorder %s72, %s88
      %p90 = scmp.eq.s32.totalorder %s22, 0
      %p91 = por %p89, %p90
      %s92 = ssub.s32 %s23, %s35
      %s93 = ssub.s32 %s24, %s31
      %s94 = sor.u32 %s92, %s93
      %p95 = scmp.eq.s32.totalorder %s94, 0
      %s97 = sadd.s32 %s96, 1
      %s98 = scalar_select %p95, %s96, %s97
      %p101 = pneg %p95
      %p102 = scmp.eq.s32.totalorder %s16, 7
      %p103 = por %p101, %p102
      %p104 = scmp.ne.s32.totalorder %s96, %s99
      %p105 = scmp.eq.s32.totalorder %s16, 0
      %p106 = por %p104, %p105
      %p107 = scmp.ne.s32.totalorder %s96, %s99
      %p108 = scmp.eq.s32.totalorder %s21, 7
      %p109 = por %p107, %p108
      %p110 = scmp.ne.s32.totalorder %s99, %s100
      %p111 = scmp.eq.s32.totalorder %s21, 0
      %p112 = por %p110, %p111
      %p113 = scmp.ne.s32.totalorder %s99, %s100
      %p114 = scmp.eq.s32.totalorder %s22, 7
      %p115 = por %p113, %p114
      %p117 = scmp.ne.s32.totalorder %s100, %s116
      %p118 = scmp.eq.s32.totalorder %s22, 0
      %p119 = por %p117, %p118
      %s121 = sadd.s32 %s120, 1
      %p124 = scmp.eq.s32.totalorder %s16, 7
      %p125 = scmp.ne.s32.totalorder %s120, %s122
      %p126 = scmp.eq.s32.totalorder %s16, 0
      %p127 = por %p125, %p126
      %p128 = scmp.ne.s32.totalorder %s120, %s122
      %p129 = scmp.eq.s32.totalorder %s21, 7
      %p130 = por %p128, %p129
      %p131 = scmp.ne.s32.totalorder %s122, %s123
      %p132 = scmp.eq.s32.totalorder %s21, 0
      %p133 = por %p131, %p132
      %p134 = scmp.ne.s32.totalorder %s122, %s123
      %p135 = scmp.eq.s32.totalorder %s22, 7
      %p136 = por %p134, %p135
      %p138 = scmp.ne.s32.totalorder %s123, %s137
      %p139 = scmp.eq.s32.totalorder %s22, 0
      %p140 = por %p138, %p139
      %s142 = sadd.s32 %s141, 1
      %p145 = scmp.eq.s32.totalorder %s16, 7
      %p146 = scmp.ne.s32.totalorder %s141, %s143
      %p147 = scmp.eq.s32.totalorder %s16, 0
      %p148 = por %p146, %p147
      %p149 = scmp.ne.s32.totalorder %s141, %s143
      %p150 = scmp.eq.s32.totalorder %s21, 7
      %p151 = por %p149, %p150
      %p152 = scmp.ne.s32.totalorder %s143, %s144
      %p153 = scmp.eq.s32.totalorder %s21, 0
      %p154 = por %p152, %p153
      %p155 = scmp.ne.s32.totalorder %s143, %s144
      %p156 = scmp.eq.s32.totalorder %s22, 7
      %p157 = por %p155, %p156
      %p159 = scmp.ne.s32.totalorder %s144, %s158
      %p160 = scmp.eq.s32.totalorder %s22, 0
      %p161 = por %p159, %p160
      %s163 = sadd.s32 %s162, 1
      %p166 = scmp.eq.s32.totalorder %s16, 7
      %p167 = scmp.ne.s32.totalorder %s162, %s164
      %p168 = scmp.eq.s32.totalorder %s16, 0
      %p169 = por %p167, %p168
      %p170 = scmp.ne.s32.totalorder %s162, %s164
      %p171 = scmp.eq.s32.totalorder %s21, 7
      %p172 = por %p170, %p171
      %p173 = scmp.ne.s32.totalorder %s164, %s165
      %p174 = scmp.eq.s32.totalorder %s21, 0
      %p175 = por %p173, %p174
      %p176 = scmp.ne.s32.totalorder %s164, %s165
      %p177 = scmp.eq.s32.totalorder %s22, 7
      %p178 = por %p176, %p177
      %p180 = scmp.ne.s32.totalorder %s165, %s179
      %p181 = scmp.eq.s32.totalorder %s22, 0
      %p182 = por %p180, %p181
      %s184 = sadd.s32 %s183, 1
      %p187 = scmp.eq.s32.totalorder %s16, 7
      %p188 = scmp.ne.s32.totalorder %s183, %s185
      %p189 = scmp.eq.s32.totalorder %s16, 0
      %p190 = por %p188, %p189
      %p191 = scmp.ne.s32.totalorder %s183, %s185
      %p192 = scmp.eq.s32.totalorder %s21, 7
      %p193 = por %p191, %p192
      %p194 = scmp.ne.s32.totalorder %s185, %s186
      %p195 = scmp.eq.s32.totalorder %s21, 0
      %p196 = por %p194, %p195
      %p197 = scmp.ne.s32.totalorder %s185, %s186
      %p198 = scmp.eq.s32.totalorder %s22, 7
      %p199 = por %p197, %p198
      %p201 = scmp.ne.s32.totalorder %s186, %s200
      %p202 = scmp.eq.s32.totalorder %s22, 0
      %p203 = por %p201, %p202
      %s204 = ssub.s32 %s23, %s35
      %s205 = ssub.s32 %s24, %s31
      %s206 = sor.u32 %s204, %s205
      %p207 = scmp.eq.s32.totalorder %s206, 0
      %s209 = sadd.s32 %s208, 1
      %s210 = scalar_select %p207, %s208, %s209
      %p213 = pneg %p207
      %p214 = scmp.eq.s32.totalorder %s16, 7
      %p215 = por %p213, %p214
      %p216 = scmp.ne.s32.totalorder %s208, %s211
      %p217 = scmp.eq.s32.totalorder %s16, 0
      %p218 = por %p216, %p217
      %p219 = scmp.ne.s32.totalorder %s208, %s211
      %p220 = scmp.eq.s32.totalorder %s21, 7
      %p221 = por %p219, %p220
      %p222 = scmp.ne.s32.totalorder %s211, %s212
      %p223 = scmp.eq.s32.totalorder %s21, 0
      %p224 = por %p222, %p223
      %p225 = scmp.ne.s32.totalorder %s211, %s212
      %p226 = scmp.eq.s32.totalorder %s22, 7
      %p227 = por %p225, %p226
      %p229 = scmp.ne.s32.totalorder %s212, %s228
      %p230 = scmp.eq.s32.totalorder %s22, 0
      %p231 = por %p229, %p230
      %p232 = scmp.le.s32.totalorder 1, %s16
      %p233 = scmp.lt.s32.totalorder %s16, 9
      %p234 = pnand %p232, %p233
      %p235 = pneg %p234
      // Predicated region
      $region9: #{residual_unit_pallas.3} parent=5 // pred_check
        _
      $region10: #{residual_unit_pallas.3} parent=5 // pred_check_branch
        %237 = sbr.rel (%p234) target = $region12
      $region11: #{residual_unit_pallas.3} parent=5 // pred_region
        %s238 = ssub.s32 %s16, 1
        // Predicated region
        $region13: #{residual_unit_pallas.3} parent=11 // pred_check
          %p239 = pneg %p133
        $region14: #{residual_unit_pallas.3} parent=11 // pred_check_branch
          %241 = sbr.rel (%p239) target = $region16
        $region15: #{residual_unit_pallas.3} parent=11 // pred_region
          _
        $region16: #{residual_unit_pallas.3} parent=11 // pred_fallthru
          _
        // Predicated region
        $region17: #{residual_unit_pallas.3} parent=11 // pred_check
          %p242 = pneg %p154
        $region18: #{residual_unit_pallas.3} parent=11 // pred_check_branch
          %244 = sbr.rel (%p242) target = $region20
        $region19: #{residual_unit_pallas.3} parent=11 // pred_region
          _
        $region20: #{residual_unit_pallas.3} parent=11 // pred_fallthru
          _
        // Predicated region
        $region21: #{residual_unit_pallas.3} parent=11 // pred_check
          %p245 = pneg %p175
        $region22: #{residual_unit_pallas.3} parent=11 // pred_check_branch
          %247 = sbr.rel (%p245) target = $region24
        $region23: #{residual_unit_pallas.3} parent=11 // pred_region
          _
        $region24: #{residual_unit_pallas.3} parent=11 // pred_fallthru
          _
        // Predicated region
        $region25: #{residual_unit_pallas.3} parent=11 // pred_check
          %p248 = pneg %p196
        $region26: #{residual_unit_pallas.3} parent=11 // pred_check_branch
          %250 = sbr.rel (%p248) target = $region28
        $region27: #{residual_unit_pallas.3} parent=11 // pred_region
          _
        $region28: #{residual_unit_pallas.3} parent=11 // pred_fallthru
          _
      $region12: #{residual_unit_pallas.3} parent=5 // pred_fallthru
        _
      %p251 = scmp.lt.s32.totalorder %s16, 8
      // Predicated region
      $region29: #{residual_unit_pallas.3} parent=5 // pred_check
        %p252 = pneg %p251
      $region30: #{residual_unit_pallas.3} parent=5 // pred_check_branch
        %254 = sbr.rel (%p252) target = $region32
      $region31: #{residual_unit_pallas.3} parent=5 // pred_region
        // Predicated region
        $region33: #{residual_unit_pallas.3} parent=31 // pred_check
          %p255 = pneg %p50
        $region34: #{residual_unit_pallas.3} parent=31 // pred_check_branch
          %257 = sbr.rel (%p255) target = $region36
        $region35: #{residual_unit_pallas.3} parent=31 // pred_region
          %s258 = sand.u32 %s40, 1
          %s259 = sand.u32 %s40, 1
          %s260 = smul.addr %s259, 32
          %s261 = scalar_lea.vmem [#allocation2], %s260
          %s262 = smul.addr %s23, 16
          %s263 = sadd.s32 %s24, %s262
          %s264 = smul.addr %s263, 8
          %s265 = scalar_lea.vmem %s0, %s264
          // Predicated region
          $region37: #{residual_unit_pallas.3} parent=35 // pred_check
            _
          $region38: #{residual_unit_pallas.3} parent=35 // pred_check_branch
            %267 = sbr.rel (0) target = $region40
          $region39: #{residual_unit_pallas.3} parent=35 // pred_region
            // Predicated region
            $region41: #{residual_unit_pallas.3} parent=39 // pred_check
              _
            $region42: #{residual_unit_pallas.3} parent=39 // pred_check_branch
              %269 = sbr.rel (0) target = $region44
            $region43: #{residual_unit_pallas.3} parent=39 // pred_region
              // Predicated region
              $region56: #{residual_unit_pallas.3} parent=43 // pred_check
                _
              $region57: #{residual_unit_pallas.3} parent=43 // pred_check_branch
                %291 = sbr.rel (0) target = $region59
              $region58: #{residual_unit_pallas.3} parent=43 // pred_region
                loop: start=0, step=1, limit=1
                $region60: #{residual_unit_pallas.3} parent=58 // loop_pre_header
                  _
                $region61: #{residual_unit_pallas.3} parent=58 // loop_header
                  %s293 = sphi 0, %s297
                  %p294 = scmp.ge.s32.totalorder %s293, 1
                  %s298 = sphi %s265, %s265
                  %s299 = sphi %s261, %s261
                $region62: #{residual_unit_pallas.3} parent=58 // loop_header_branch
                  %296 = sbr.rel (%p294) target = $region66
                $region63: #{residual_unit_pallas.3} parent=58 // loop_body
                  %v300 = vld [vmem:[%s298] sm:$0xff]
                  %301 = vst [vmem:[%s299] sm:$0xff] %v300
                  %v302 = vld [vmem:[%s298 + $0x20] sm:$0xff]
                  %303 = vst [vmem:[%s299 + $0x8] sm:$0xff] %v302
                  %v304 = vld [vmem:[%s298 + $0x40] sm:$0xff]
                  %305 = vst [vmem:[%s299 + $0x10] sm:$0xff] %v304
                  %v306 = vld [vmem:[%s298 + $0x60] sm:$0xff]
                  %307 = vst [vmem:[%s299 + $0x18] sm:$0xff] %v306
                $region64: #{residual_unit_pallas.3} parent=58 // loop_footer
                  %s297 = sadd.s32 1, %s293
                $region65: #{residual_unit_pallas.3} parent=58 // loop_footer_branch
                  %292 = sbr.rel target = $region61
                $region66: #{residual_unit_pallas.3} parent=58 // loop_exit
                  _
              $region59: #{residual_unit_pallas.3} parent=43 // pred_fallthru
                _
              // Predicated region
              $region67: #{residual_unit_pallas.3} parent=43 // pred_check
                _
              $region68: #{residual_unit_pallas.3} parent=43 // pred_check_branch
                %309 = sbr.rel target = $region70
              $region69: #{residual_unit_pallas.3} parent=43 // pred_region
                _
              $region70: #{residual_unit_pallas.3} parent=43 // pred_fallthru
                _
            $region44: #{residual_unit_pallas.3} parent=39 // pred_fallthru
              _
            // Predicated region
            $region45: #{residual_unit_pallas.3} parent=39 // pred_check
              _
            $region46: #{residual_unit_pallas.3} parent=39 // pred_check_branch
              %271 = sbr.rel target = $region48
            $region47: #{residual_unit_pallas.3} parent=39 // pred_region
              %s273 = ssub.s32 256, 1
              loop: start=0, step=1, limit=1
              $region49: #{residual_unit_pallas.3} parent=47 // loop_pre_header
                _
              $region50: #{residual_unit_pallas.3} parent=47 // loop_header
                %s275 = sphi 0, %s279
                %p276 = scmp.ge.s32.totalorder %s275, 1
                %s280 = sphi %s265, %s265
                %s281 = sphi %s261, %s261
              $region51: #{residual_unit_pallas.3} parent=47 // loop_header_branch
                %278 = sbr.rel (%p276) target = $region55
              $region52: #{residual_unit_pallas.3} parent=47 // loop_body
                %v282 = vld [vmem:[%s280] sm:%s273]
                %283 = vst [vmem:[%s281] sm:%s273] %v282
                %v284 = vld [vmem:[%s280 + $0x20] sm:%s273]
                %285 = vst [vmem:[%s281 + $0x8] sm:%s273] %v284
                %v286 = vld [vmem:[%s280 + $0x40] sm:%s273]
                %287 = vst [vmem:[%s281 + $0x10] sm:%s273] %v286
                %v288 = vld [vmem:[%s280 + $0x60] sm:%s273]
                %289 = vst [vmem:[%s281 + $0x18] sm:%s273] %v288
              $region53: #{residual_unit_pallas.3} parent=47 // loop_footer
                %s279 = sadd.s32 1, %s275
              $region54: #{residual_unit_pallas.3} parent=47 // loop_footer_branch
                %274 = sbr.rel target = $region50
              $region55: #{residual_unit_pallas.3} parent=47 // loop_exit
                _
            $region48: #{residual_unit_pallas.3} parent=39 // pred_fallthru
              _
          $region40: #{residual_unit_pallas.3} parent=35 // pred_fallthru
            _
          %310 = vnop
        $region36: #{residual_unit_pallas.3} parent=31 // pred_fallthru
          _
        // Predicated region
        $region71: #{residual_unit_pallas.3} parent=31 // pred_check
          %p311 = pneg %p78
        $region72: #{residual_unit_pallas.3} parent=31 // pred_check_branch
          %313 = sbr.rel (%p311) target = $region74
        $region73: #{residual_unit_pallas.3} parent=31 // pred_region
          %p314 = scmp.lt.s32.totalorder %s23, 1
          %s315 = scalar_select %p314, %s23, 1
          %p316 = scmp.lt.s32.totalorder %s24, 3
          %s317 = scalar_select %p316, %s24, 3
          %s318 = smul.addr %s317, 4
          %s319 = smul.addr %s315, 16
          %s320 = sadd.s32 %s318, %s319
          %s321 = smul.addr %s320, 8
          %s322 = scalar_lea.vmem %s1, %s321
        $region74: #{residual_unit_pallas.3} parent=31 // pred_fallthru
          _
        // Predicated region
        $region75: #{residual_unit_pallas.3} parent=31 // pred_check
          %p323 = pneg %p106
        $region76: #{residual_unit_pallas.3} parent=31 // pred_check_branch
          %325 = sbr.rel (%p323) target = $region78
        $region77: #{residual_unit_pallas.3} parent=31 // pred_region
          %s326 = sand.u32 %s96, 1
          %s327 = sand.u32 %s96, 1
          %s328 = smul.addr %s327, 32
          %s329 = scalar_lea.vmem [#allocation3], %s328
          %s330 = smul.addr %s23, 16
          %s331 = sadd.s32 %s24, %s330
          %s332 = smul.addr %s331, 8
          %s333 = scalar_lea.vmem %s2, %s332
          // Predicated region
          $region79: #{residual_unit_pallas.3} parent=77 // pred_check
            _
          $region80: #{residual_unit_pallas.3} parent=77 // pred_check_branch
            %335 = sbr.rel (0) target = $region82
          $region81: #{residual_unit_pallas.3} parent=77 // pred_region
            // Predicated region
            $region83: #{residual_unit_pallas.3} parent=81 // pred_check
              _
            $region84: #{residual_unit_pallas.3} parent=81 // pred_check_branch
              %337 = sbr.rel (0) target = $region86
            $region85: #{residual_unit_pallas.3} parent=81 // pred_region
              // Predicated region
              $region98: #{residual_unit_pallas.3} parent=85 // pred_check
                _
              $region99: #{residual_unit_pallas.3} parent=85 // pred_check_branch
                %359 = sbr.rel (0) target = $region101
              $region100: #{residual_unit_pallas.3} parent=85 // pred_region
                loop: start=0, step=1, limit=1
                $region102: #{residual_unit_pallas.3} parent=100 // loop_pre_header
                  _
                $region103: #{residual_unit_pallas.3} parent=100 // loop_header
                  %s361 = sphi 0, %s365
                  %p362 = scmp.ge.s32.totalorder %s361, 1
                  %s366 = sphi %s333, %s333
                  %s367 = sphi %s329, %s329
                $region104: #{residual_unit_pallas.3} parent=100 // loop_header_branch
                  %364 = sbr.rel (%p362) target = $region108
                $region105: #{residual_unit_pallas.3} parent=100 // loop_body
                  %v368 = vld [vmem:[%s366] sm:$0xff]
                  %369 = vst [vmem:[%s367] sm:$0xff] %v368
                  %v370 = vld [vmem:[%s366 + $0x20] sm:$0xff]
                  %371 = vst [vmem:[%s367 + $0x8] sm:$0xff] %v370
                  %v372 = vld [vmem:[%s366 + $0x40] sm:$0xff]
                  %373 = vst [vmem:[%s367 + $0x10] sm:$0xff] %v372
                  %v374 = vld [vmem:[%s366 + $0x60] sm:$0xff]
                  %375 = vst [vmem:[%s367 + $0x18] sm:$0xff] %v374
                $region106: #{residual_unit_pallas.3} parent=100 // loop_footer
                  %s365 = sadd.s32 1, %s361
                $region107: #{residual_unit_pallas.3} parent=100 // loop_footer_branch
                  %360 = sbr.rel target = $region103
                $region108: #{residual_unit_pallas.3} parent=100 // loop_exit
                  _
              $region101: #{residual_unit_pallas.3} parent=85 // pred_fallthru
                _
              // Predicated region
              $region109: #{residual_unit_pallas.3} parent=85 // pred_check
                _
              $region110: #{residual_unit_pallas.3} parent=85 // pred_check_branch
                %377 = sbr.rel target = $region112
              $region111: #{residual_unit_pallas.3} parent=85 // pred_region
                _
              $region112: #{residual_unit_pallas.3} parent=85 // pred_fallthru
                _
            $region86: #{residual_unit_pallas.3} parent=81 // pred_fallthru
              _
            // Predicated region
            $region87: #{residual_unit_pallas.3} parent=81 // pred_check
              _
            $region88: #{residual_unit_pallas.3} parent=81 // pred_check_branch
              %339 = sbr.rel target = $region90
            $region89: #{residual_unit_pallas.3} parent=81 // pred_region
              %s341 = ssub.s32 256, 1
              loop: start=0, step=1, limit=1
              $region91: #{residual_unit_pallas.3} parent=89 // loop_pre_header
                _
              $region92: #{residual_unit_pallas.3} parent=89 // loop_header
                %s343 = sphi 0, %s347
                %p344 = scmp.ge.s32.totalorder %s343, 1
                %s348 = sphi %s333, %s333
                %s349 = sphi %s329, %s329
              $region93: #{residual_unit_pallas.3} parent=89 // loop_header_branch
                %346 = sbr.rel (%p344) target = $region97
              $region94: #{residual_unit_pallas.3} parent=89 // loop_body
                %v350 = vld [vmem:[%s348] sm:%s341]
                %351 = vst [vmem:[%s349] sm:%s341] %v350
                %v352 = vld [vmem:[%s348 + $0x20] sm:%s341]
                %353 = vst [vmem:[%s349 + $0x8] sm:%s341] %v352
                %v354 = vld [vmem:[%s348 + $0x40] sm:%s341]
                %355 = vst [vmem:[%s349 + $0x10] sm:%s341] %v354
                %v356 = vld [vmem:[%s348 + $0x60] sm:%s341]
                %357 = vst [vmem:[%s349 + $0x18] sm:%s341] %v356
              $region95: #{residual_unit_pallas.3} parent=89 // loop_footer
                %s347 = sadd.s32 1, %s343
              $region96: #{residual_unit_pallas.3} parent=89 // loop_footer_branch
                %342 = sbr.rel target = $region92
              $region97: #{residual_unit_pallas.3} parent=89 // loop_exit
                _
            $region90: #{residual_unit_pallas.3} parent=81 // pred_fallthru
              _
          $region82: #{residual_unit_pallas.3} parent=77 // pred_fallthru
            _
          %378 = vnop
        $region78: #{residual_unit_pallas.3} parent=31 // pred_fallthru
          _
      $region32: #{residual_unit_pallas.3} parent=5 // pred_fallthru
        _
      %p379 = scmp.le.s32.totalorder 1, %s16
      %p380 = scmp.lt.s32.totalorder %s16, 9
      %p381 = pnand %p379, %p380
      %p382 = pneg %p381
      // Predicated region
      $region113: #{residual_unit_pallas.3} parent=5 // pred_check
        _
      $region114: #{residual_unit_pallas.3} parent=5 // pred_check_branch
        %384 = sbr.rel (%p381) target = $region116
      $region115: #{residual_unit_pallas.3} parent=5 // pred_region
        %s385 = ssub.s32 %s16, 1
        %s386 = sand.u32 %s43, 1
        %s387 = sand.u32 %s43, 1
        %s388 = smul.addr %s387, 32
        %s389 = scalar_lea.vmem [#allocation2], %s388
        // Predicated region
        $region117: #{residual_unit_pallas.3} parent=115 // pred_check
          %p390 = pneg %p56
        $region118: #{residual_unit_pallas.3} parent=115 // pred_check_branch
          %392 = sbr.rel (%p390) target = $region120
        $region119: #{residual_unit_pallas.3} parent=115 // pred_region
          _
        $region120: #{residual_unit_pallas.3} parent=115 // pred_fallthru
          _
        %s393 = sand.u32 %s99, 1
        %s394 = sand.u32 %s99, 1
        %s395 = smul.addr %s394, 32
        %s396 = scalar_lea.vmem [#allocation3], %s395
        // Predicated region
        $region121: #{residual_unit_pallas.3} parent=115 // pred_check
          %p397 = pneg %p112
        $region122: #{residual_unit_pallas.3} parent=115 // pred_check_branch
          %399 = sbr.rel (%p397) target = $region124
        $region123: #{residual_unit_pallas.3} parent=115 // pred_region
          _
        $region124: #{residual_unit_pallas.3} parent=115 // pred_fallthru
          _
        %s400 = sand.u32 %s43, 1
        %s401 = sand.u32 %s43, 1
        %s402 = smul.addr %s401, 32
        %s403 = scalar_lea.vmem [#allocation2], %s402
        %p404 = pneg %p56
        %p405 = pneg %p53
        %p406 = scmp.lt.s32.totalorder %s25, 1
        %s407 = scalar_select %p406, %s25, 1
        %p408 = scmp.lt.s32.totalorder %s26, 3
        %s409 = scalar_select %p408, %s26, 3
        %s410 = smul.addr %s409, 4
        %s411 = smul.addr %s407, 16
        %s412 = sadd.s32 %s410, %s411
        %s413 = smul.addr %s412, 8
        %s414 = scalar_lea.vmem %s1, %s413
        %p415 = pneg %p84
        %p416 = pneg %p81
        %s417 = sand.u32 %s99, 1
        %s418 = sand.u32 %s99, 1
        %s419 = smul.addr %s418, 32
        %s420 = scalar_lea.vmem [#allocation3], %s419
        %p421 = pneg %p112
        %p422 = pneg %p109
        %p423 = pneg %p133
        %p424 = pneg %p130
        %p425 = pneg %p154
        %p426 = pneg %p151
        %p427 = pneg %p175
        %p428 = pneg %p172
        %p429 = pneg %p196
        %p430 = pneg %p193
        %p431 = pneg %p224
        %p432 = pneg %p221
        %s433 = sand.u32 %s211, 1
        %s434 = scalar_lea.sflag [#allocation5], %s433
        %s435 = sand.u32 %s211, 1
        %s436 = smul.addr %s435, 32
        %s437 = scalar_lea.vmem [#allocation4], %s436
        %p438 = scmp.lt.s32.totalorder %s25, 1
        %s439 = scalar_select %p438, %s25, 1
        %p440 = scmp.lt.s32.totalorder %s26, 3
        %s441 = scalar_select %p440, %s26, 3
        %s442 = smul.addr %s441, 4
        %s443 = smul.addr %s439, 16
        %s444 = sadd.s32 %s442, %s443
        %s445 = smul.addr %s444, 8
        %s446 = scalar_lea.vmem %s1, %s445
        %v448 = vld [vmem:[%s389] sm:$0xff]
        %v449 = vld [vmem:[%s389 + $0x8] sm:$0xff]
        %v450 = vld [vmem:[%s389 + $0x10] sm:$0xff]
        %v451 = vld [vmem:[%s389 + $0x18] sm:$0xff]
        %v452 = vld [vmem:[%s446] sm:$0xff]
        %v453 = vld [vmem:[%s446 + $0x8] sm:$0xff]
        %v454 = vld [vmem:[%s446 + $0x10] sm:$0xff]
        %v455 = vld [vmem:[%s446 + $0x18] sm:$0xff]
        %v456 = vld [vmem:[%s3] sm:$0xff]
        %v457 = vld [vmem:[%s3 + $0x8] sm:$0xff]
        %v458 = vld [vmem:[%s3 + $0x10] sm:$0xff]
        %v459 = vld [vmem:[%s3 + $0x18] sm:$0xff]
        %v460 = vld [vmem:[%s4] sm:$0xff]
        %v461 = vld [vmem:[%s4 + $0x8] sm:$0xff]
        %v462 = vld [vmem:[%s4 + $0x10] sm:$0xff]
        %v463 = vld [vmem:[%s4 + $0x18] sm:$0xff]
        %v464 = vld [vmem:[%s5] sm:$0xf]
        %v465 = vld [vmem:[%s5 + $0x4] sm:$0xf]
        %v466 = vld [vmem:[%s5 + $0x8] sm:$0xf]
        %v467 = vld [vmem:[%s5 + $0xc] sm:$0xf]
        %469 = vset.pattern.permute.xlu0 0
        %470 = vperm.xlu0 %469, %v456
        %v471 = vpop.permute.xlu0 %470
        %474 = vset.pattern.permute.xlu0 0
        %475 = vperm.xlu0 %474, %v457
        %v476 = vpop.permute.xlu0 %475
        %479 = vset.pattern.permute.xlu0 0
        %480 = vperm.xlu0 %479, %v458
        %v481 = vpop.permute.xlu0 %480
        %484 = vset.pattern.permute.xlu0 0
        %485 = vperm.xlu0 %484, %v459
        %v486 = vpop.permute.xlu0 %485
        %v488 = vmul.f32 %v448, %v471
        %v489 = vmul.f32 %v449, %v476
        %v490 = vmul.f32 %v450, %v481
        %v491 = vmul.f32 %v451, %v486
        %493 = vset.pattern.permute.xlu0 0
        %494 = vperm.xlu0 %493, %v460
        %v495 = vpop.permute.xlu0 %494
        %498 = vset.pattern.permute.xlu0 0
        %499 = vperm.xlu0 %498, %v461
        %v500 = vpop.permute.xlu0 %499
        %503 = vset.pattern.permute.xlu0 0
        %504 = vperm.xlu0 %503, %v462
        %v505 = vpop.permute.xlu0 %504
        %508 = vset.pattern.permute.xlu0 0
        %509 = vperm.xlu0 %508, %v463
        %v510 = vpop.permute.xlu0 %509
        %v512 = vadd.f32 %v488, %v495
        %v513 = vadd.f32 %v489, %v500
        %v514 = vadd.f32 %v490, %v505
        %v515 = vadd.f32 %v491, %v510
        %vm516 = vcmp.gt.f32.partialorder %v512, 0.0
        %vm517 = vcmp.gt.f32.partialorder %v513, 0.0
        %vm518 = vcmp.gt.f32.partialorder %v514, 0.0
        %vm519 = vcmp.gt.f32.partialorder %v515, 0.0
        %v520 = vmul.f32 %v512, 0.1
        %v521 = vmul.f32 %v513, 0.1
        %v522 = vmul.f32 %v514, 0.1
        %v523 = vmul.f32 %v515, 0.1
        %v524 = vsel %vm516, %v512, %v520
        %v525 = vsel %vm517, %v513, %v521
        %v526 = vsel %vm518, %v514, %v522
        %v527 = vsel %vm519, %v515, %v523
        %v528 = vmul.f32 %v452, %v471
        %v529 = vmul.f32 %v453, %v476
        %v530 = vmul.f32 %v454, %v481
        %v531 = vmul.f32 %v455, %v486
        %v532 = vadd.f32 %v528, %v495
        %v533 = vadd.f32 %v529, %v500
        %v534 = vadd.f32 %v530, %v505
        %v535 = vadd.f32 %v531, %v510
        %vm536 = vcmp.gt.f32.partialorder %v532, 0.0
        %vm537 = vcmp.gt.f32.partialorder %v533, 0.0
        %vm538 = vcmp.gt.f32.partialorder %v534, 0.0
        %vm539 = vcmp.gt.f32.partialorder %v535, 0.0
        %v540 = vmul.f32 %v532, 0.1
        %v541 = vmul.f32 %v533, 0.1
        %v542 = vmul.f32 %v534, 0.1
        %v543 = vmul.f32 %v535, 0.1
        %v544 = vsel %vm536, %v532, %v540
        %v545 = vsel %vm537, %v533, %v541
        %v546 = vsel %vm538, %v534, %v542
        %v547 = vsel %vm539, %v535, %v543
        %p548 = scmp.gt.s32.totalorder %s26, 0
        %s549 = scalar_select %p548, 1, 0
        %s550 = scvt.s32.f32 %s549
        %p551 = scmp.lt.s32.totalorder %s26, 3
        %s552 = scalar_select %p551, 1, 0
        %s553 = scvt.s32.f32 %s552
        %v554 = vstv %s550
        %v555 = vmul.f32 %v544, %v554
        %v556 = vmul.f32 %v545, %v554
        %v557 = vmul.f32 %v546, %v554
        %v558 = vmul.f32 %v547, %v554
        %v559 = vstv %s553
        %v560 = vmul.f32 %v544, %v559
        %v561 = vmul.f32 %v545, %v559
        %v562 = vmul.f32 %v546, %v559
        %v563 = vmul.f32 %v547, %v559
        %568 = vrot.lane.b32.xlu0 %v524, 2
        %v569 = vpop.permute.xlu0 %568
        %570 = vrot.lane.b32.xlu0 %v525, 2
        %v571 = vpop.permute.xlu0 %570
        %572 = vrot.lane.b32.xlu0 %v526, 2
        %v573 = vpop.permute.xlu0 %572
        %574 = vrot.lane.b32.xlu0 %v527, 2
        %v575 = vpop.permute.xlu0 %574
        %vm580 = vcmask 15360
        %v581 = vsel %vm580, %v555, %v569
        %v582 = vsel %vm580, %v556, %v571
        %v583 = vsel %vm580, %v557, %v573
        %v584 = vsel %vm580, %v558, %v575
        %v585 = vsel %vm580, %v569, %v560
        %v586 = vsel %vm580, %v571, %v561
        %v587 = vsel %vm580, %v573, %v562
        %v588 = vsel %vm580, %v575, %v563
        %597 = vrot.lane.b32.xlu0 %v581, 126
        %v598 = vpop.permute.xlu0 %597
        %599 = vrot.lane.b32.xlu0 %v585, 126
        %v600 = vpop.permute.xlu0 %599
        %601 = vrot.lane.b32.xlu0 %v582, 126
        %v602 = vpop.permute.xlu0 %601
        %603 = vrot.lane.b32.xlu0 %v586, 126
        %v604 = vpop.permute.xlu0 %603
        %605 = vrot.lane.b32.xlu0 %v583, 126
        %v606 = vpop.permute.xlu0 %605
        %607 = vrot.lane.b32.xlu0 %v587, 126
        %v608 = vpop.permute.xlu0 %607
        %609 = vrot.lane.b32.xlu0 %v584, 126
        %v610 = vpop.permute.xlu0 %609
        %611 = vrot.lane.b32.xlu0 %v588, 126
        %v612 = vpop.permute.xlu0 %611
        %vm613 = vcmask 1031168
        %v614 = vsel %vm613, %v598, %v600
        %v615 = vsel %vm613, %v602, %v604
        %v616 = vsel %vm613, %v606, %v608
        %v617 = vsel %vm613, %v610, %v612
        %622 = vrot.lane.b32.xlu0 %v581, 124
        %v623 = vpop.permute.xlu0 %622
        %624 = vrot.lane.b32.xlu0 %v585, 124
        %v625 = vpop.permute.xlu0 %624
        %626 = vrot.lane.b32.xlu0 %v582, 124
        %v627 = vpop.permute.xlu0 %626
        %628 = vrot.lane.b32.xlu0 %v586, 124
        %v629 = vpop.permute.xlu0 %628
        %630 = vrot.lane.b32.xlu0 %v583, 124
        %v631 = vpop.permute.xlu0 %630
        %632 = vrot.lane.b32.xlu0 %v587, 124
        %v633 = vpop.permute.xlu0 %632
        %634 = vrot.lane.b32.xlu0 %v584, 124
        %v635 = vpop.permute.xlu0 %634
        %636 = vrot.lane.b32.xlu0 %v588, 124
        %v637 = vpop.permute.xlu0 %636
        %vm638 = vcmask 1014784
        %v639 = vsel %vm638, %v623, %v625
        %v640 = vsel %vm638, %v627, %v629
        %v641 = vsel %vm638, %v631, %v633
        %v642 = vsel %vm638, %v635, %v637
        %v647 = vpack.c.bf16 %v582, %v581
        %v648 = vpack.c.bf16 %v584, %v583
        %v649 = vpack.c.bf16 %v615, %v614
        %v650 = vpack.c.bf16 %v617, %v616
        %v651 = vpack.c.bf16 %v640, %v639
        %v652 = vpack.c.bf16 %v642, %v641
        %v657 = vunpack.c.l.b16 %v464
        %v658 = vunpack.c.l.b16 %v465
        %v659 = vunpack.c.l.b16 %v466
        %v660 = vunpack.c.l.b16 %v467
        %v661 = vpack.c.b16 %v658, %v657
        %v662 = vpack.c.b16 %v660, %v659
        %vm663 = vcmask 785408
        %v665 = vsel %vm663, %v661, 0
        %v668 = vsel %vm663, %v662, 0
        %670 = vmatpush.bf16.msra.mxu0 0
        %671 = vmatpush.bf16.msra.mxu0 0
        %672 = vmatpush.bf16.msra.mxu0 %v652
        %673 = vmatpush.bf16.msra.mxu0 %v651
        %674 = vmatpush.bf16.msra.mxu0 %v650
        %675 = vmatpush.bf16.msra.mxu0 %v649
        %676 = vmatpush.bf16.msra.mxu0 %v648
        %677 = vmatpush.bf16.msra.mxu0 %v647
        %678 = vmatmul.bf16.gmra.mxu0 %v665
        %v679 = vpop.f32.mrf.mxu0
        %v680 = vadd.f32 0.0, %v679
        %v681 = vpop.f32.mrf.mxu0
        %v682 = vadd.f32 0.0, %v681
        %683 = vmatmul.bf16.gmra.mxu0 %v668
        %v684 = vpop.f32.mrf.mxu0
        %v685 = vadd.f32 0.0, %v684
        %v686 = vpop.f32.mrf.mxu0
        %v687 = vadd.f32 0.0, %v686
        %688 = vdwg.mxu0
        %v689 = vld [vmem:[%s396] sm:$0xff]
        %v690 = vld [vmem:[%s396 + $0x8] sm:$0xff]
        %v691 = vld [vmem:[%s396 + $0x10] sm:$0xff]
        %v692 = vld [vmem:[%s396 + $0x18] sm:$0xff]
        %v693 = vadd.f32 %v689, %v680
        %v694 = vadd.f32 %v690, %v682
        %v695 = vadd.f32 %v691, %v685
        %v696 = vadd.f32 %v692, %v687
        %v697 = vld [vmem:[%s6] sm:$0xff]
        %v698 = vld [vmem:[%s6 + $0x8] sm:$0xff]
        %v699 = vld [vmem:[%s6 + $0x10] sm:$0xff]
        %v700 = vld [vmem:[%s6 + $0x18] sm:$0xff]
        %702 = vset.pattern.permute.xlu0 0
        %703 = vperm.xlu0 %702, %v697
        %v704 = vpop.permute.xlu0 %703
        %707 = vset.pattern.permute.xlu0 0
        %708 = vperm.xlu0 %707, %v698
        %v709 = vpop.permute.xlu0 %708
        %712 = vset.pattern.permute.xlu0 0
        %713 = vperm.xlu0 %712, %v699
        %v714 = vpop.permute.xlu0 %713
        %717 = vset.pattern.permute.xlu0 0
        %718 = vperm.xlu0 %717, %v700
        %v719 = vpop.permute.xlu0 %718
        %v721 = vadd.f32 %v693, %v704
        %v722 = vadd.f32 %v694, %v709
        %v723 = vadd.f32 %v695, %v714
        %v724 = vadd.f32 %v696, %v719
        %725 = vst [vmem:[%s437] sm:$0xff] %v721
        %726 = vst [vmem:[%s437 + $0x8] sm:$0xff] %v722
        %727 = vst [vmem:[%s437 + $0x10] sm:$0xff] %v723
        %728 = vst [vmem:[%s437 + $0x18] sm:$0xff] %v724
        %s729 = sand.u32 %s211, 1
        %s730 = scalar_lea.sflag [#allocation5], %s729
        %s731 = sand.u32 %s211, 1
        %s732 = smul.addr %s731, 32
        %s733 = scalar_lea.vmem [#allocation4], %s732
        // Predicated region
        $region125: #{residual_unit_pallas.3} parent=115 // pred_check
          %p734 = pneg %p221
        $region126: #{residual_unit_pallas.3} parent=115 // pred_check_branch
          %736 = sbr.rel (%p734) target = $region128
        $region127: #{residual_unit_pallas.3} parent=115 // pred_region
          %738 = vsyncadd %s730, 0
          %s739 = smul.addr %s25, 16
          %s740 = sadd.s32 %s26, %s739
          %s741 = smul.addr %s740, 8
          %s742 = scalar_lea.hbm %s7, %s741
          %s743 = sshll.u32 %s733, 4
          %s744 = int_to_ptr.vmem [resolvable:$true] %s743
          %s745 = sshll.u32 %s742, 4
          %s746 = int_to_ptr.hbm [resolvable:$true] %s745
          %751 = dma.vmem_to_hbm [thread:$0]  %s744, 512, %s746, %s730, 128, 512, 8
        $region128: #{residual_unit_pallas.3} parent=115 // pred_fallthru
          _
      $region116: #{residual_unit_pallas.3} parent=5 // pred_fallthru
        _
      %p752 = scmp.le.s32.totalorder 2, %s16
      // Predicated region
      $region129: #{residual_unit_pallas.3} parent=5 // pred_check
        %p753 = pneg %p752
      $region130: #{residual_unit_pallas.3} parent=5 // pred_check_branch
        %755 = sbr.rel (%p753) target = $region132
      $region131: #{residual_unit_pallas.3} parent=5 // pred_region
        %s756 = ssub.s32 %s16, 2
        // Predicated region
        $region133: #{residual_unit_pallas.3} parent=131 // pred_check
          %p757 = pneg %p227
        $region134: #{residual_unit_pallas.3} parent=131 // pred_check_branch
          %759 = sbr.rel (%p757) target = $region136
        $region135: #{residual_unit_pallas.3} parent=131 // pred_region
          %s760 = sand.u32 %s212, 1
          %s761 = scalar_lea.sflag [#allocation5], %s760
          %s762 = sand.u32 %s212, 1
          %s763 = smul.addr %s762, 32
          %s764 = scalar_lea.vmem [#allocation4], %s763
          %766 = dma.done %s761, 512
        $region136: #{residual_unit_pallas.3} parent=131 // pred_fallthru
          _
      $region132: #{residual_unit_pallas.3} parent=5 // pred_fallthru
        _
    $region6: #{residual_unit_pallas.3} parent=1 // loop_footer
      %s20 = sadd.s32 1, %s16
    $region7: #{residual_unit_pallas.3} parent=1 // loop_footer_branch
      %15 = sbr.rel target = $region3
    $region8: #{residual_unit_pallas.3} parent=1 // loop_exit
      _
    %767 = vsyncpa [#allocation5], 1
    %s768 = scalar_lea.sflag [#allocation5], 1
    %769 = vsyncpa %s768, 1

</llo_original>
